<compile_context>
chip_gen: v7x
topology: tpu7x:2x2x1
jax: 0.10.0
libtpu: 0.0.40
codegen_flags: <defaults>
</compile_context>

<pallas_src>
import functools

import jax
import jax.numpy as jnp
from jax import lax
from jax.experimental import pallas as pl
from jax.experimental.pallas import tpu as pltpu

# --- small hyperparameters consistent with hp.* in the module ---
N_MELS = 16        # hp.n_mels_channel
HIDDEN = 32        # hp.hidden_dim
NUM_LAYER = 2      # hp.num_layer
SPEAKER_DIM = 16   # hp.speaker_dim
BATCH = 2
SEQ = 8


def speaker_encoder_kernel(x_ref, w8_ref, badd_ref, slab_ref, pw_ref, pb_ref,
                           o_ref, *, pad_b):
    """Whole forward pass in VMEM (shapes are tiny; no grid needed).

    x_ref    : ((T+1)*PB, F)  time-major input, batch zero-padded to PB sublanes, plus
                              one trailing all-zero time block for the final
                              layer-1-only wave (its gate add reduces to the bias row).
    w8_ref   : (F, 8H)   layer-0 input weights in fused gate layout
                         [i0 i1 f0 f1 g0 g1 o0 o1] (layer-1 columns zero), g cols x2.
    badd_ref : (1, 8H)   biases in the fused layout (b0 in layer-0 cols, b1 in layer-1
                         cols), g cols x2.
    slab_ref : (2H, 8H)  recurrent wavefront slab [[Whh0^T, Wih1^T], [0, Whh1^T]] in
                         the fused layout, g cols x2.
    pw_ref   : (H, S)    projection weight, pre-transposed.
    pb_ref   : (1, S)    projection bias.
    o_ref    : (B, S)    output (real batch rows only).
    """
    H = slab_ref.shape[0] // 2
    H2 = 2 * H
    PB = pad_b
    B = o_ref.shape[0]
    n_waves = x_ref.shape[0] // PB          # T + 1

    # Hoisted layer-0 input projection for all timesteps, already in fused gate layout.
    xg = jnp.dot(x_ref[...], w8_ref[...],
                 preferred_element_type=jnp.float32) + badd_ref[...]   # ((T+1)*PB, 8H)
    slab = slab_ref[...]

    def wave_elem(gates, ccat):
        # gates: (PB, 8H) pre-activations, cols [i0 i1 f0 f1 2*g0 2*g1 o0 o1].
        # Single sigmoid pass over the whole 8H slab; tanh(x) = 2*sigmoid(2x) - 1
        # recovers the g gates.  One tanh over the concatenated (PB, 2H) cell state.
        # TODO(synk): if the 64-lane gate slices below show up as relayout copies in
        # the bundle dump, realign them with pltpu.roll (XLU slot is idle here).
        s = jax.nn.sigmoid(gates)
        icat = s[:, 0 * H2:1 * H2]
        fcat = s[:, 1 * H2:2 * H2]
        gcat = 2.0 * s[:, 2 * H2:3 * H2] - 1.0
        ocat = s[:, 3 * H2:4 * H2]
        ccat_new = fcat * ccat + icat * gcat
        hcat_new = ocat * jnp.tanh(ccat_new)
        return hcat_new, ccat_new

    # ---- wave 0: layer-0 step 0 only; zero initial state => no matmul at all. ----
    s0 = jax.nn.sigmoid(xg[0:PB, :])
    i0 = s0[:, 0 * H2:1 * H2]
    g0 = 2.0 * s0[:, 2 * H2:3 * H2] - 1.0
    o0 = s0[:, 3 * H2:4 * H2]
    # Keep the layer-1 half of the state exactly zero (b1 must not leak into h1_{-1}).
    lane = lax.broadcasted_iota(jnp.int32, (PB, H2), 1)
    lmask = (lane < H).astype(jnp.float32)
    ccat = (i0 * g0) * lmask                # c0_{-1} = 0 so the f*c term vanishes
    hcat = o0 * jnp.tanh(ccat)              # layer-1 half is o * tanh(0) == 0

    # ---- waves 1..T: ONE fused (PB,2H)@(2H,8H) matmul per wave. ----
    # Wave w produces layer-0 gates for step w (i0/f0/g0/o0 cols) and layer-1 gates for
    # step w-1 (i1/f1/g1/o1 cols); hcat/ccat carry [h0_{w-1} | h1_{w-2}].  Fully
    # unrolled so the LLO scheduler can interleave MXU / EUP / VPU across waves.
    # TODO(synk): stage `slab` in the MXU weight registers once via
    # pltpu.matmul_push_rhs + per-wave matmul_acc_lhs/matmul_pop (constant RHS).
    for w in range(1, n_waves):
        gates = xg[w * PB:(w + 1) * PB, :] + jnp.dot(
            hcat, slab, preferred_element_type=jnp.float32)
        hcat, ccat = wave_elem(gates, ccat)

    # hcat lanes H:2H == top-layer hidden at the last real timestep.
    h_last = hcat[:, H:H2]
    proj = jnp.dot(h_last, pw_ref[...],
                   preferred_element_type=jnp.float32) + pb_ref[...]   # (PB, S)
    projb = proj[:B, :]          # drop padded batch rows before the global norm
    # torch.norm(x): Frobenius norm over the WHOLE output tensor (matches the module).
    o_ref[...] = projb * lax.rsqrt(jnp.sum(projb * projb))


def _interleave_gates(m0, m1, h):
    """Columns [i f g o] of two 4H-wide mats -> fused [i0 i1 f0 f1 g0 g1 o0 o1]."""
    parts = []
    for q in range(4):
        parts.append(m0[..., q * h:(q + 1) * h])
        parts.append(m1[..., q * h:(q + 1) * h])
    return jnp.concatenate(parts, axis=-1)


def prepare_params(params):
    """One-time parameter prep: transpose, build the wavefront slab, interleave gate
    columns (gate-major, layer-minor), and pre-scale the g-gate columns by 2 so a
    single sigmoid pass recovers tanh.

    NOTE: real PyTorch LSTMs have separate b_ih / b_hh per layer; when porting real
    weights set b{k} = b_ih_l{k} + b_hh_l{k} (both are zero-initialized here).
    """
    H = HIDDEN
    f32 = jnp.float32

    def gscale(m):  # g-gate blocks live in fused columns 4H:6H
        return m.at[..., 4 * H:6 * H].multiply(2.0)

    wih0_t = params["wih0"].T.astype(f32)                 # (F, 4H)
    whh0_t = params["whh0"].T.astype(f32)                 # (H, 4H)
    wih1_t = params["wih1"].T.astype(f32)                 # (H, 4H)
    whh1_t = params["whh1"].T.astype(f32)                 # (H, 4H)

    w8 = gscale(_interleave_gates(
        wih0_t, jnp.zeros((wih0_t.shape[0], 4 * H), f32), H))           # (F, 8H)
    badd = gscale(_interleave_gates(
        params["b0"].astype(f32)[None, :],
        params["b1"].astype(f32)[None, :], H))                          # (1, 8H)
    slab_top = _interleave_gates(whh0_t, wih1_t, H)                     # (H, 8H)
    slab_bot = _interleave_gates(jnp.zeros((H, 4 * H), f32), whh1_t, H)  # (H, 8H)
    slab = gscale(jnp.concatenate([slab_top, slab_bot], axis=0))        # (2H, 8H)

    pw = params["pw"].T.astype(f32)                                     # (H, S)
    pb = params["pb"].astype(f32)[None, :]                              # (1, S)
    return (w8, badd, slab, pw, pb)


@jax.jit
def speaker_encoder(x, prepared):
    """x: (B, T, F) batch_first, as in the PyTorch module. prepared: prepare_params(...)."""
    B, T, F = x.shape
    PB = max(8, ((B + 7) // 8) * 8)      # pad batch to the 8-sublane tile

    # Time-major layout, batch zero-padded to PB sublanes, plus one trailing all-zero
    # time block for the final layer-1-only wave.
    # TODO(synk): emit this layout directly from the data producer to avoid the extra
    # transpose/pad dispatch in front of a ~1 us kernel.
    x_tm = jnp.zeros((T + 1, PB, F), jnp.float32)
    x_tm = x_tm.at[:T, :B, :].set(jnp.transpose(x, (1, 0, 2)).astype(jnp.float32))
    x2d = x_tm.reshape((T + 1) * PB, F)

    vmem = pl.BlockSpec(memory_space=pltpu.MemorySpace.VMEM)
    ins = (x2d,) + tuple(prepared)
    # No grid / no tiling: footprint < 100 KiB everywhere (incl. v7x's 64 MiB VMEM);
    # per-grid-step overhead (~0.35 us) would exceed the whole kernel.  Batch is far
    # too small to split across TensorCores profitably.
    return pl.pallas_call(
        functools.partial(speaker_encoder_kernel, pad_b=PB),
        out_shape=jax.ShapeDtypeStruct((B, SPEAKER_DIM), jnp.float32),
        in_specs=[vmem] * len(ins),
        out_specs=vmem,
    )(*ins)


# ---------------- parameter init (deterministic, mirrors the module) ----------------
def xavier_normal(key, shape):
    fan_out, fan_in = shape
    std = (2.0 / (fan_in + fan_out)) ** 0.5
    return std * jax.random.normal(key, shape, jnp.float32)


def init_params(key):
    ks = jax.random.split(key, 6)
    params = {
        # LSTM layer 0: weight_ih_l0 (4H, F), weight_hh_l0 (4H, H), biases -> 0.0
        "wih0": xavier_normal(ks[0], (4 * HIDDEN, N_MELS)),
        "whh0": xavier_normal(ks[1], (4 * HIDDEN, HIDDEN)),
        "b0": jnp.zeros((4 * HIDDEN,), jnp.float32),
        # LSTM layer 1: weight_ih_l1 (4H, H), weight_hh_l1 (4H, H), biases -> 0.0
        "wih1": xavier_normal(ks[2], (4 * HIDDEN, HIDDEN)),
        "whh1": xavier_normal(ks[3], (4 * HIDDEN, HIDDEN)),
        "b1": jnp.zeros((4 * HIDDEN,), jnp.float32),
        # projection Linear(H, S): default PyTorch uniform(-1/sqrt(H), 1/sqrt(H))
        "pw": jax.random.uniform(ks[4], (SPEAKER_DIM, HIDDEN), jnp.float32,
                                 -1.0 / HIDDEN ** 0.5, 1.0 / HIDDEN ** 0.5),
        "pb": jax.random.uniform(ks[5], (SPEAKER_DIM,), jnp.float32,
                                 -1.0 / HIDDEN ** 0.5, 1.0 / HIDDEN ** 0.5),
    }
    return params


# ---------------- pure-JAX reference (same math as the PyTorch module) ----------------
def reference(x, p):
    B, T, F = x.shape
    h0 = c0 = h1 = c1 = jnp.zeros((B, HIDDEN), jnp.float32)

    def cell(xt, h, c, wih, whh, b):
        g = xt @ wih.T + h @ whh.T + b
        H = HIDDEN
        i = jax.nn.sigmoid(g[:, 0 * H:1 * H])
        f = jax.nn.sigmoid(g[:, 1 * H:2 * H])
        gg = jnp.tanh(g[:, 2 * H:3 * H])
        o = jax.nn.sigmoid(g[:, 3 * H:4 * H])
        c = f * c + i * gg
        return o * jnp.tanh(c), c

    for t in range(T):
        xt = x[:, t, :]
        h0, c0 = cell(xt, h0, c0, p["wih0"], p["whh0"], p["b0"])
        h1, c1 = cell(h0, h1, c1, p["wih1"], p["whh1"], p["b1"])
    proj = h1 @ p["pw"].T + p["pb"]
    return proj / jnp.sqrt(jnp.sum(proj * proj))


if __name__ == "__main__":
    key = jax.random.PRNGKey(0)
    kx, kp = jax.random.split(key)
    x = jax.random.normal(kx, (BATCH, SEQ, N_MELS), jnp.float32)
    params = init_params(kp)
    prepared = prepare_params(params)

    out = speaker_encoder(x, prepared)
    out = jax.block_until_ready(out)

    ref = reference(x, params)
    assert out.shape == (BATCH, SPEAKER_DIM)
    assert jnp.allclose(out, ref, atol=1e-4, rtol=1e-4), "mismatch vs reference"
    print("KERNEL_OK")
</pallas_src>

<mosaic_0001>
module attributes {stable_mosaic.version = 11 : i64} {
  func.func @speaker_encoder_kernel(%arg0: memref<72x16xf32, #tpu.memory_space<vmem>>, %arg1: memref<16x256xf32, #tpu.memory_space<vmem>>, %arg2: memref<1x256xf32, #tpu.memory_space<vmem>>, %arg3: memref<64x256xf32, #tpu.memory_space<vmem>>, %arg4: memref<32x16xf32, #tpu.memory_space<vmem>>, %arg5: memref<1x16xf32, #tpu.memory_space<vmem>>, %arg6: memref<2x16xf32, #tpu.memory_space<vmem>>) attributes {dimension_semantics = [], scalar_prefetch = 0 : i64, scratch_operands = 0 : i64, tpu.core_type = #tpu.core_type<tc>} {
    %c0 = arith.constant 0 : index
    %c0_0 = arith.constant 0 : index
    %0 = vector.load %arg0[%c0, %c0_0] : memref<72x16xf32, #tpu.memory_space<vmem>>, vector<72x16xf32>
    %c0_1 = arith.constant 0 : index
    %c0_2 = arith.constant 0 : index
    %1 = vector.load %arg1[%c0_1, %c0_2] : memref<16x256xf32, #tpu.memory_space<vmem>>, vector<16x256xf32>
    %cst = arith.constant dense<0.000000e+00> : vector<72x256xf32>
    %2 = tpu.matmul %0, %1, %cst {dimension_numbers = #tpu.dot_dimension_numbers<[1], [0], [0], [1], [0, 0, 1, 1], [], []>} : vector<72x16xf32>, vector<16x256xf32>, vector<72x256xf32> -> vector<72x256xf32>
    %c0_3 = arith.constant 0 : index
    %c0_4 = arith.constant 0 : index
    %3 = vector.load %arg2[%c0_3, %c0_4] : memref<1x256xf32, #tpu.memory_space<vmem>>, vector<1x256xf32>
    %4 = vector.broadcast %3 : vector<1x256xf32> to vector<72x256xf32>
    %5 = arith.addf %2, %4 : vector<72x256xf32>
    %c0_5 = arith.constant 0 : index
    %c0_6 = arith.constant 0 : index
    %6 = vector.load %arg3[%c0_5, %c0_6] : memref<64x256xf32, #tpu.memory_space<vmem>>, vector<64x256xf32>
    %7 = vector.extract_strided_slice %5 {offsets = [0, 0], sizes = [8, 256], strides = [1, 1]} : vector<72x256xf32> to vector<8x256xf32>
    %8 = arith.negf %7 : vector<8x256xf32>
    %9 = math.exp %8 : vector<8x256xf32>
    %cst_7 = arith.constant 1.000000e+00 : f32
    %10 = vector.broadcast %cst_7 : f32 to vector<8x256xf32>
    %11 = arith.addf %10, %9 : vector<8x256xf32>
    %12 = arith.divf %10, %11 : vector<8x256xf32>
    %13 = vector.extract_strided_slice %12 {offsets = [0, 0], sizes = [8, 64], strides = [1, 1]} : vector<8x256xf32> to vector<8x64xf32>
    %14 = vector.extract_strided_slice %12 {offsets = [0, 128], sizes = [8, 64], strides = [1, 1]} : vector<8x256xf32> to vector<8x64xf32>
    %cst_8 = arith.constant 2.000000e+00 : f32
    %15 = vector.broadcast %cst_8 : f32 to vector<8x64xf32>
    %16 = arith.mulf %15, %14 : vector<8x64xf32>
    %cst_9 = arith.constant 1.000000e+00 : f32
    %17 = vector.broadcast %cst_9 : f32 to vector<8x64xf32>
    %18 = arith.subf %16, %17 : vector<8x64xf32>
    %19 = vector.extract_strided_slice %12 {offsets = [0, 192], sizes = [8, 64], strides = [1, 1]} : vector<8x256xf32> to vector<8x64xf32>
    %20 = tpu.iota {dimensions = array<i32: 1>} : vector<8x64xi32>
    %c32_i32 = arith.constant 32 : i32
    %21 = vector.broadcast %c32_i32 : i32 to vector<8x64xi32>
    %22 = arith.cmpi slt, %20, %21 : vector<8x64xi32>
    %23 = arith.extui %22 : vector<8x64xi1> to vector<8x64xi32>
    %24 = arith.sitofp %23 : vector<8x64xi32> to vector<8x64xf32>
    %25 = arith.mulf %13, %18 : vector<8x64xf32>
    %26 = arith.mulf %25, %24 : vector<8x64xf32>
    %27 = math.tanh %26 : vector<8x64xf32>
    %28 = arith.mulf %19, %27 : vector<8x64xf32>
    %29 = vector.extract_strided_slice %5 {offsets = [8, 0], sizes = [8, 256], strides = [1, 1]} : vector<72x256xf32> to vector<8x256xf32>
    %cst_10 = arith.constant dense<0.000000e+00> : vector<8x256xf32>
    %30 = tpu.matmul %28, %6, %cst_10 {dimension_numbers = #tpu.dot_dimension_numbers<[1], [0], [0], [1], [0, 0, 1, 1], [], []>} : vector<8x64xf32>, vector<64x256xf32>, vector<8x256xf32> -> vector<8x256xf32>
    %31 = arith.addf %29, %30 : vector<8x256xf32>
    %32 = arith.negf %31 : vector<8x256xf32>
    %33 = math.exp %32 : vector<8x256xf32>
    %cst_11 = arith.constant 1.000000e+00 : f32
    %34 = vector.broadcast %cst_11 : f32 to vector<8x256xf32>
    %35 = arith.addf %34, %33 : vector<8x256xf32>
    %36 = arith.divf %34, %35 : vector<8x256xf32>
    %37 = vector.extract_strided_slice %36 {offsets = [0, 0], sizes = [8, 64], strides = [1, 1]} : vector<8x256xf32> to vector<8x64xf32>
    %38 = vector.extract_strided_slice %36 {offsets = [0, 64], sizes = [8, 64], strides = [1, 1]} : vector<8x256xf32> to vector<8x64xf32>
    %39 = vector.extract_strided_slice %36 {offsets = [0, 128], sizes = [8, 64], strides = [1, 1]} : vector<8x256xf32> to vector<8x64xf32>
    %cst_12 = arith.constant 2.000000e+00 : f32
    %40 = vector.broadcast %cst_12 : f32 to vector<8x64xf32>
    %41 = arith.mulf %40, %39 : vector<8x64xf32>
    %cst_13 = arith.constant 1.000000e+00 : f32
    %42 = vector.broadcast %cst_13 : f32 to vector<8x64xf32>
    %43 = arith.subf %41, %42 : vector<8x64xf32>
    %44 = vector.extract_strided_slice %36 {offsets = [0, 192], sizes = [8, 64], strides = [1, 1]} : vector<8x256xf32> to vector<8x64xf32>
    %45 = arith.mulf %38, %26 : vector<8x64xf32>
    %46 = arith.mulf %37, %43 : vector<8x64xf32>
    %47 = arith.addf %45, %46 : vector<8x64xf32>
    %48 = math.tanh %47 : vector<8x64xf32>
    %49 = arith.mulf %44, %48 : vector<8x64xf32>
    %50 = vector.extract_strided_slice %5 {offsets = [16, 0], sizes = [8, 256], strides = [1, 1]} : vector<72x256xf32> to vector<8x256xf32>
    %cst_14 = arith.constant dense<0.000000e+00> : vector<8x256xf32>
    %51 = tpu.matmul %49, %6, %cst_14 {dimension_numbers = #tpu.dot_dimension_numbers<[1], [0], [0], [1], [0, 0, 1, 1], [], []>} : vector<8x64xf32>, vector<64x256xf32>, vector<8x256xf32> -> vector<8x256xf32>
    %52 = arith.addf %50, %51 : vector<8x256xf32>
    %53 = arith.negf %52 : vector<8x256xf32>
    %54 = math.exp %53 : vector<8x256xf32>
    %cst_15 = arith.constant 1.000000e+00 : f32
    %55 = vector.broadcast %cst_15 : f32 to vector<8x256xf32>
    %56 = arith.addf %55, %54 : vector<8x256xf32>
    %57 = arith.divf %55, %56 : vector<8x256xf32>
    %58 = vector.extract_strided_slice %57 {offsets = [0, 0], sizes = [8, 64], strides = [1, 1]} : vector<8x256xf32> to vector<8x64xf32>
    %59 = vector.extract_strided_slice %57 {offsets = [0, 64], sizes = [8, 64], strides = [1, 1]} : vector<8x256xf32> to vector<8x64xf32>
    %60 = vector.extract_strided_slice %57 {offsets = [0, 128], sizes = [8, 64], strides = [1, 1]} : vector<8x256xf32> to vector<8x64xf32>
    %cst_16 = arith.constant 2.000000e+00 : f32
    %61 = vector.broadcast %cst_16 : f32 to vector<8x64xf32>
    %62 = arith.mulf %61, %60 : vector<8x64xf32>
    %cst_17 = arith.constant 1.000000e+00 : f32
    %63 = vector.broadcast %cst_17 : f32 to vector<8x64xf32>
    %64 = arith.subf %62, %63 : vector<8x64xf32>
    %65 = vector.extract_strided_slice %57 {offsets = [0, 192], sizes = [8, 64], strides = [1, 1]} : vector<8x256xf32> to vector<8x64xf32>
    %66 = arith.mulf %59, %47 : vector<8x64xf32>
    %67 = arith.mulf %58, %64 : vector<8x64xf32>
    %68 = arith.addf %66, %67 : vector<8x64xf32>
    %69 = math.tanh %68 : vector<8x64xf32>
    %70 = arith.mulf %65, %69 : vector<8x64xf32>
    %71 = vector.extract_strided_slice %5 {offsets = [24, 0], sizes = [8, 256], strides = [1, 1]} : vector<72x256xf32> to vector<8x256xf32>
    %cst_18 = arith.constant dense<0.000000e+00> : vector<8x256xf32>
    %72 = tpu.matmul %70, %6, %cst_18 {dimension_numbers = #tpu.dot_dimension_numbers<[1], [0], [0], [1], [0, 0, 1, 1], [], []>} : vector<8x64xf32>, vector<64x256xf32>, vector<8x256xf32> -> vector<8x256xf32>
    %73 = arith.addf %71, %72 : vector<8x256xf32>
    %74 = arith.negf %73 : vector<8x256xf32>
    %75 = math.exp %74 : vector<8x256xf32>
    %cst_19 = arith.constant 1.000000e+00 : f32
    %76 = vector.broadcast %cst_19 : f32 to vector<8x256xf32>
    %77 = arith.addf %76, %75 : vector<8x256xf32>
    %78 = arith.divf %76, %77 : vector<8x256xf32>
    %79 = vector.extract_strided_slice %78 {offsets = [0, 0], sizes = [8, 64], strides = [1, 1]} : vector<8x256xf32> to vector<8x64xf32>
    %80 = vector.extract_strided_slice %78 {offsets = [0, 64], sizes = [8, 64], strides = [1, 1]} : vector<8x256xf32> to vector<8x64xf32>
    %81 = vector.extract_strided_slice %78 {offsets = [0, 128], sizes = [8, 64], strides = [1, 1]} : vector<8x256xf32> to vector<8x64xf32>
    %cst_20 = arith.constant 2.000000e+00 : f32
    %82 = vector.broadcast %cst_20 : f32 to vector<8x64xf32>
    %83 = arith.mulf %82, %81 : vector<8x64xf32>
    %cst_21 = arith.constant 1.000000e+00 : f32
    %84 = vector.broadcast %cst_21 : f32 to vector<8x64xf32>
    %85 = arith.subf %83, %84 : vector<8x64xf32>
    %86 = vector.extract_strided_slice %78 {offsets = [0, 192], sizes = [8, 64], strides = [1, 1]} : vector<8x256xf32> to vector<8x64xf32>
    %87 = arith.mulf %80, %68 : vector<8x64xf32>
    %88 = arith.mulf %79, %85 : vector<8x64xf32>
    %89 = arith.addf %87, %88 : vector<8x64xf32>
    %90 = math.tanh %89 : vector<8x64xf32>
    %91 = arith.mulf %86, %90 : vector<8x64xf32>
    %92 = vector.extract_strided_slice %5 {offsets = [32, 0], sizes = [8, 256], strides = [1, 1]} : vector<72x256xf32> to vector<8x256xf32>
    %cst_22 = arith.constant dense<0.000000e+00> : vector<8x256xf32>
    %93 = tpu.matmul %91, %6, %cst_22 {dimension_numbers = #tpu.dot_dimension_numbers<[1], [0], [0], [1], [0, 0, 1, 1], [], []>} : vector<8x64xf32>, vector<64x256xf32>, vector<8x256xf32> -> vector<8x256xf32>
    %94 = arith.addf %92, %93 : vector<8x256xf32>
    %95 = arith.negf %94 : vector<8x256xf32>
    %96 = math.exp %95 : vector<8x256xf32>
    %cst_23 = arith.constant 1.000000e+00 : f32
    %97 = vector.broadcast %cst_23 : f32 to vector<8x256xf32>
    %98 = arith.addf %97, %96 : vector<8x256xf32>
    %99 = arith.divf %97, %98 : vector<8x256xf32>
    %100 = vector.extract_strided_slice %99 {offsets = [0, 0], sizes = [8, 64], strides = [1, 1]} : vector<8x256xf32> to vector<8x64xf32>
    %101 = vector.extract_strided_slice %99 {offsets = [0, 64], sizes = [8, 64], strides = [1, 1]} : vector<8x256xf32> to vector<8x64xf32>
    %102 = vector.extract_strided_slice %99 {offsets = [0, 128], sizes = [8, 64], strides = [1, 1]} : vector<8x256xf32> to vector<8x64xf32>
    %cst_24 = arith.constant 2.000000e+00 : f32
    %103 = vector.broadcast %cst_24 : f32 to vector<8x64xf32>
    %104 = arith.mulf %103, %102 : vector<8x64xf32>
    %cst_25 = arith.constant 1.000000e+00 : f32
    %105 = vector.broadcast %cst_25 : f32 to vector<8x64xf32>
    %106 = arith.subf %104, %105 : vector<8x64xf32>
    %107 = vector.extract_strided_slice %99 {offsets = [0, 192], sizes = [8, 64], strides = [1, 1]} : vector<8x256xf32> to vector<8x64xf32>
    %108 = arith.mulf %101, %89 : vector<8x64xf32>
    %109 = arith.mulf %100, %106 : vector<8x64xf32>
    %110 = arith.addf %108, %109 : vector<8x64xf32>
    %111 = math.tanh %110 : vector<8x64xf32>
    %112 = arith.mulf %107, %111 : vector<8x64xf32>
    %113 = vector.extract_strided_slice %5 {offsets = [40, 0], sizes = [8, 256], strides = [1, 1]} : vector<72x256xf32> to vector<8x256xf32>
    %cst_26 = arith.constant dense<0.000000e+00> : vector<8x256xf32>
    %114 = tpu.matmul %112, %6, %cst_26 {dimension_numbers = #tpu.dot_dimension_numbers<[1], [0], [0], [1], [0, 0, 1, 1], [], []>} : vector<8x64xf32>, vector<64x256xf32>, vector<8x256xf32> -> vector<8x256xf32>
    %115 = arith.addf %113, %114 : vector<8x256xf32>
    %116 = arith.negf %115 : vector<8x256xf32>
    %117 = math.exp %116 : vector<8x256xf32>
    %cst_27 = arith.constant 1.000000e+00 : f32
    %118 = vector.broadcast %cst_27 : f32 to vector<8x256xf32>
    %119 = arith.addf %118, %117 : vector<8x256xf32>
    %120 = arith.divf %118, %119 : vector<8x256xf32>
    %121 = vector.extract_strided_slice %120 {offsets = [0, 0], sizes = [8, 64], strides = [1, 1]} : vector<8x256xf32> to vector<8x64xf32>
    %122 = vector.extract_strided_slice %120 {offsets = [0, 64], sizes = [8, 64], strides = [1, 1]} : vector<8x256xf32> to vector<8x64xf32>
    %123 = vector.extract_strided_slice %120 {offsets = [0, 128], sizes = [8, 64], strides = [1, 1]} : vector<8x256xf32> to vector<8x64xf32>
    %cst_28 = arith.constant 2.000000e+00 : f32
    %124 = vector.broadcast %cst_28 : f32 to vector<8x64xf32>
    %125 = arith.mulf %124, %123 : vector<8x64xf32>
    %cst_29 = arith.constant 1.000000e+00 : f32
    %126 = vector.broadcast %cst_29 : f32 to vector<8x64xf32>
    %127 = arith.subf %125, %126 : vector<8x64xf32>
    %128 = vector.extract_strided_slice %120 {offsets = [0, 192], sizes = [8, 64], strides = [1, 1]} : vector<8x256xf32> to vector<8x64xf32>
    %129 = arith.mulf %122, %110 : vector<8x64xf32>
    %130 = arith.mulf %121, %127 : vector<8x64xf32>
    %131 = arith.addf %129, %130 : vector<8x64xf32>
    %132 = math.tanh %131 : vector<8x64xf32>
    %133 = arith.mulf %128, %132 : vector<8x64xf32>
    %134 = vector.extract_strided_slice %5 {offsets = [48, 0], sizes = [8, 256], strides = [1, 1]} : vector<72x256xf32> to vector<8x256xf32>
    %cst_30 = arith.constant dense<0.000000e+00> : vector<8x256xf32>
    %135 = tpu.matmul %133, %6, %cst_30 {dimension_numbers = #tpu.dot_dimension_numbers<[1], [0], [0], [1], [0, 0, 1, 1], [], []>} : vector<8x64xf32>, vector<64x256xf32>, vector<8x256xf32> -> vector<8x256xf32>
    %136 = arith.addf %134, %135 : vector<8x256xf32>
    %137 = arith.negf %136 : vector<8x256xf32>
    %138 = math.exp %137 : vector<8x256xf32>
    %cst_31 = arith.constant 1.000000e+00 : f32
    %139 = vector.broadcast %cst_31 : f32 to vector<8x256xf32>
    %140 = arith.addf %139, %138 : vector<8x256xf32>
    %141 = arith.divf %139, %140 : vector<8x256xf32>
    %142 = vector.extract_strided_slice %141 {offsets = [0, 0], sizes = [8, 64], strides = [1, 1]} : vector<8x256xf32> to vector<8x64xf32>
    %143 = vector.extract_strided_slice %141 {offsets = [0, 64], sizes = [8, 64], strides = [1, 1]} : vector<8x256xf32> to vector<8x64xf32>
    %144 = vector.extract_strided_slice %141 {offsets = [0, 128], sizes = [8, 64], strides = [1, 1]} : vector<8x256xf32> to vector<8x64xf32>
    %cst_32 = arith.constant 2.000000e+00 : f32
    %145 = vector.broadcast %cst_32 : f32 to vector<8x64xf32>
    %146 = arith.mulf %145, %144 : vector<8x64xf32>
    %cst_33 = arith.constant 1.000000e+00 : f32
    %147 = vector.broadcast %cst_33 : f32 to vector<8x64xf32>
    %148 = arith.subf %146, %147 : vector<8x64xf32>
    %149 = vector.extract_strided_slice %141 {offsets = [0, 192], sizes = [8, 64], strides = [1, 1]} : vector<8x256xf32> to vector<8x64xf32>
    %150 = arith.mulf %143, %131 : vector<8x64xf32>
    %151 = arith.mulf %142, %148 : vector<8x64xf32>
    %152 = arith.addf %150, %151 : vector<8x64xf32>
    %153 = math.tanh %152 : vector<8x64xf32>
    %154 = arith.mulf %149, %153 : vector<8x64xf32>
    %155 = vector.extract_strided_slice %5 {offsets = [56, 0], sizes = [8, 256], strides = [1, 1]} : vector<72x256xf32> to vector<8x256xf32>
    %cst_34 = arith.constant dense<0.000000e+00> : vector<8x256xf32>
    %156 = tpu.matmul %154, %6, %cst_34 {dimension_numbers = #tpu.dot_dimension_numbers<[1], [0], [0], [1], [0, 0, 1, 1], [], []>} : vector<8x64xf32>, vector<64x256xf32>, vector<8x256xf32> -> vector<8x256xf32>
    %157 = arith.addf %155, %156 : vector<8x256xf32>
    %158 = arith.negf %157 : vector<8x256xf32>
    %159 = math.exp %158 : vector<8x256xf32>
    %cst_35 = arith.constant 1.000000e+00 : f32
    %160 = vector.broadcast %cst_35 : f32 to vector<8x256xf32>
    %161 = arith.addf %160, %159 : vector<8x256xf32>
    %162 = arith.divf %160, %161 : vector<8x256xf32>
    %163 = vector.extract_strided_slice %162 {offsets = [0, 0], sizes = [8, 64], strides = [1, 1]} : vector<8x256xf32> to vector<8x64xf32>
    %164 = vector.extract_strided_slice %162 {offsets = [0, 64], sizes = [8, 64], strides = [1, 1]} : vector<8x256xf32> to vector<8x64xf32>
    %165 = vector.extract_strided_slice %162 {offsets = [0, 128], sizes = [8, 64], strides = [1, 1]} : vector<8x256xf32> to vector<8x64xf32>
    %cst_36 = arith.constant 2.000000e+00 : f32
    %166 = vector.broadcast %cst_36 : f32 to vector<8x64xf32>
    %167 = arith.mulf %166, %165 : vector<8x64xf32>
    %cst_37 = arith.constant 1.000000e+00 : f32
    %168 = vector.broadcast %cst_37 : f32 to vector<8x64xf32>
    %169 = arith.subf %167, %168 : vector<8x64xf32>
    %170 = vector.extract_strided_slice %162 {offsets = [0, 192], sizes = [8, 64], strides = [1, 1]} : vector<8x256xf32> to vector<8x64xf32>
    %171 = arith.mulf %164, %152 : vector<8x64xf32>
    %172 = arith.mulf %163, %169 : vector<8x64xf32>
    %173 = arith.addf %171, %172 : vector<8x64xf32>
    %174 = math.tanh %173 : vector<8x64xf32>
    %175 = arith.mulf %170, %174 : vector<8x64xf32>
    %176 = vector.extract_strided_slice %5 {offsets = [64, 0], sizes = [8, 256], strides = [1, 1]} : vector<72x256xf32> to vector<8x256xf32>
    %cst_38 = arith.constant dense<0.000000e+00> : vector<8x256xf32>
    %177 = tpu.matmul %175, %6, %cst_38 {dimension_numbers = #tpu.dot_dimension_numbers<[1], [0], [0], [1], [0, 0, 1, 1], [], []>} : vector<8x64xf32>, vector<64x256xf32>, vector<8x256xf32> -> vector<8x256xf32>
    %178 = arith.addf %176, %177 : vector<8x256xf32>
    %179 = arith.negf %178 : vector<8x256xf32>
    %180 = math.exp %179 : vector<8x256xf32>
    %cst_39 = arith.constant 1.000000e+00 : f32
    %181 = vector.broadcast %cst_39 : f32 to vector<8x256xf32>
    %182 = arith.addf %181, %180 : vector<8x256xf32>
    %183 = arith.divf %181, %182 : vector<8x256xf32>
    %184 = vector.extract_strided_slice %183 {offsets = [0, 0], sizes = [8, 64], strides = [1, 1]} : vector<8x256xf32> to vector<8x64xf32>
    %185 = vector.extract_strided_slice %183 {offsets = [0, 64], sizes = [8, 64], strides = [1, 1]} : vector<8x256xf32> to vector<8x64xf32>
    %186 = vector.extract_strided_slice %183 {offsets = [0, 128], sizes = [8, 64], strides = [1, 1]} : vector<8x256xf32> to vector<8x64xf32>
    %cst_40 = arith.constant 2.000000e+00 : f32
    %187 = vector.broadcast %cst_40 : f32 to vector<8x64xf32>
    %188 = arith.mulf %187, %186 : vector<8x64xf32>
    %cst_41 = arith.constant 1.000000e+00 : f32
    %189 = vector.broadcast %cst_41 : f32 to vector<8x64xf32>
    %190 = arith.subf %188, %189 : vector<8x64xf32>
    %191 = vector.extract_strided_slice %183 {offsets = [0, 192], sizes = [8, 64], strides = [1, 1]} : vector<8x256xf32> to vector<8x64xf32>
    %192 = arith.mulf %185, %173 : vector<8x64xf32>
    %193 = arith.mulf %184, %190 : vector<8x64xf32>
    %194 = arith.addf %192, %193 : vector<8x64xf32>
    %195 = math.tanh %194 : vector<8x64xf32>
    %196 = arith.mulf %191, %195 : vector<8x64xf32>
    %197 = vector.extract_strided_slice %196 {offsets = [0, 32], sizes = [8, 32], strides = [1, 1]} : vector<8x64xf32> to vector<8x32xf32>
    %c0_42 = arith.constant 0 : index
    %c0_43 = arith.constant 0 : index
    %198 = vector.load %arg4[%c0_42, %c0_43] : memref<32x16xf32, #tpu.memory_space<vmem>>, vector<32x16xf32>
    %cst_44 = arith.constant dense<0.000000e+00> : vector<8x16xf32>
    %199 = tpu.matmul %197, %198, %cst_44 {dimension_numbers = #tpu.dot_dimension_numbers<[1], [0], [0], [1], [0, 0, 1, 1], [], []>} : vector<8x32xf32>, vector<32x16xf32>, vector<8x16xf32> -> vector<8x16xf32>
    %c0_45 = arith.constant 0 : index
    %c0_46 = arith.constant 0 : index
    %200 = vector.load %arg5[%c0_45, %c0_46] : memref<1x16xf32, #tpu.memory_space<vmem>>, vector<1x16xf32>
    %201 = vector.broadcast %200 : vector<1x16xf32> to vector<8x16xf32>
    %202 = arith.addf %199, %201 : vector<8x16xf32>
    %203 = vector.extract_strided_slice %202 {offsets = [0, 0], sizes = [2, 16], strides = [1, 1]} : vector<8x16xf32> to vector<2x16xf32>
    %204 = arith.mulf %203, %203 : vector<2x16xf32>
    %205 = vector.shape_cast %204 : vector<2x16xf32> to vector<1x2x16xf32>
    %cst_47 = arith.constant dense<0.000000e+00> : vector<1xf32>
    %206 = vector.multi_reduction <add>, %205, %cst_47 [1, 2] : vector<1x2x16xf32> to vector<1xf32>
    %207 = vector.shape_cast %206 : vector<1xf32> to vector<1x1x1xf32>
    %208 = vector.extract %207[0, 0, 0] : f32 from vector<1x1x1xf32>
    %209 = math.rsqrt %208 : f32
    %210 = vector.broadcast %209 : f32 to vector<2x16xf32>
    %211 = arith.mulf %203, %210 : vector<2x16xf32>
    %c0_48 = arith.constant 0 : index
    %c0_49 = arith.constant 0 : index
    %212 = vector.load %arg6[%c0_48, %c0_49] : memref<2x16xf32, #tpu.memory_space<vmem>>, vector<2x16xf32>
    tpu.vector_store %arg6[%c0_48, %c0_49], %211 {strides = array<i32>} : memref<2x16xf32, #tpu.memory_space<vmem>>, vector<2x16xf32>,
    return
  }
}

</mosaic_0001>

<llo_original>
// kernel: speaker_encoder.1
$region0: #{speaker_encoder.1}
  #allocation0 [shape = 'u32[]', space=smem, size = 0x4, offset = 0x4, fixed_abs, tag = 'smem constant byte address 0x4 - core index']
  #allocation1 [shape = 'u32[144,128]{1,0:T(1,128)}', space=vmem, size = 0x12000, scoped, tag = 'internal scratch']
  %s0 = inlined_call_operand.vmem [shape: f32[72,16], index: 0, kind: input, shape index: {}]
  %s1 = inlined_call_operand.vmem [shape: f32[16,256], index: 1, kind: input, shape index: {}]
  %s2 = inlined_call_operand.vmem [shape: f32[1,256], index: 2, kind: input, shape index: {}]
  %s3 = inlined_call_operand.vmem [shape: f32[64,256], index: 3, kind: input, shape index: {}]
  %s4 = inlined_call_operand.vmem [shape: f32[32,16], index: 4, kind: input, shape index: {}]
  %s5 = inlined_call_operand.vmem [shape: f32[1,16], index: 5, kind: input, shape index: {}]
  %s6 = inlined_call_operand.hbm [shape: f32[2,16], index: 6, kind: output, shape index: {}]
  %s7 = sld [smem:[#allocation0]]
  $region34: #{speaker_encoder.1} parent=0
    _
  %s9 = ssub.s32 1, %s7
  %s10 = scalar_select 0, %s9, %s7
  $region1: #{speaker_encoder.1} parent=0
    #allocation2 [shape = 'u8[1024]{0}', space=vmem, size = 0x400, scoped, tag = 'output window, operand 0, single buffered']
    #allocation3 [shape = 's32[1]{0}', space=sflag, size = 0x4, scoped, tag = 'scoped memory for speaker_encoder.1']
    %11 = vsyncpa [#allocation3], 0
    // Predicated region
    $region2: #{speaker_encoder.1} parent=1 // pred_check
      _
    $region3: #{speaker_encoder.1} parent=1 // pred_check_branch
      %13 = sbr.rel (0) target = $region5
    $region4: #{speaker_encoder.1} parent=1 // pred_region
      _
    $region5: #{speaker_encoder.1} parent=1 // pred_fallthru
      _
    // Predicated region
    $region6: #{speaker_encoder.1} parent=1 // pred_check
      _
    $region7: #{speaker_encoder.1} parent=1 // pred_check_branch
      %15 = sbr.rel (0) target = $region9
    $region8: #{speaker_encoder.1} parent=1 // pred_region
      _
    $region9: #{speaker_encoder.1} parent=1 // pred_fallthru
      _
    // Predicated region
    $region10: #{speaker_encoder.1} parent=1 // pred_check
      _
    $region11: #{speaker_encoder.1} parent=1 // pred_check_branch
      %17 = sbr.rel (0) target = $region13
    $region12: #{speaker_encoder.1} parent=1 // pred_region
      _
    $region13: #{speaker_encoder.1} parent=1 // pred_fallthru
      _
    // Predicated region
    $region14: #{speaker_encoder.1} parent=1 // pred_check
      _
    $region15: #{speaker_encoder.1} parent=1 // pred_check_branch
      %19 = sbr.rel (0) target = $region17
    $region16: #{speaker_encoder.1} parent=1 // pred_region
      _
    $region17: #{speaker_encoder.1} parent=1 // pred_fallthru
      _
    // Predicated region
    $region18: #{speaker_encoder.1} parent=1 // pred_check
      _
    $region19: #{speaker_encoder.1} parent=1 // pred_check_branch
      %21 = sbr.rel (0) target = $region21
    $region20: #{speaker_encoder.1} parent=1 // pred_region
      _
    $region21: #{speaker_encoder.1} parent=1 // pred_fallthru
      _
    // Predicated region
    $region22: #{speaker_encoder.1} parent=1 // pred_check
      _
    $region23: #{speaker_encoder.1} parent=1 // pred_check_branch
      %23 = sbr.rel (0) target = $region25
    $region24: #{speaker_encoder.1} parent=1 // pred_region
      _
    $region25: #{speaker_encoder.1} parent=1 // pred_fallthru
      _
    %v24 = vld [vmem:[%s0] sm:$0xff]
    %v25 = vld [vmem:[%s0 + $0x8] sm:$0xff]
    %v26 = vld [vmem:[%s0 + $0x10] sm:$0xff]
    %v27 = vld [vmem:[%s0 + $0x18] sm:$0xff]
    %v28 = vld [vmem:[%s0 + $0x20] sm:$0xff]
    %v29 = vld [vmem:[%s0 + $0x28] sm:$0xff]
    %v30 = vld [vmem:[%s0 + $0x30] sm:$0xff]
    %v31 = vld [vmem:[%s0 + $0x38] sm:$0xff]
    %v32 = vld [vmem:[%s0 + $0x40] sm:$0xff]
    %v33 = vld [vmem:[%s1] sm:$0xff]
    %v34 = vld [vmem:[%s1 + $0x8] sm:$0xff]
    %v35 = vld [vmem:[%s1 + $0x10] sm:$0xff]
    %v36 = vld [vmem:[%s1 + $0x18] sm:$0xff]
    %v37 = vld [vmem:[%s2] sm:$0x3]
    %v39 = vlaneseq
    %v40 = vshrl.u32 %v39, 7
    %v41 = vsub.s32 0, %v40
    %v42 = vrot.slane %v37, %v41
    %v43 = vlaneseq
    %v44 = vshrl.u32 %v43, 7
    %v45 = vsub.s32 1, %v44
    %v46 = vrot.slane %v37, %v45
    %vm49 = vcmask 130048
    %v51 = vsel %vm49, %v24, 0
    %v54 = vsel %vm49, %v25, 0
    %v57 = vsel %vm49, %v26, 0
    %v60 = vsel %vm49, %v27, 0
    %v63 = vsel %vm49, %v28, 0
    %v66 = vsel %vm49, %v29, 0
    %v69 = vsel %vm49, %v30, 0
    %v72 = vsel %vm49, %v31, 0
    %v75 = vsel %vm49, %v32, 0
    %77 = vmatprep.subr.mxu0 %v34
    %78 = vmatpush1.msra.mxu0 %v33
    %79 = vmatprep.subr.mxu0 %v36
    %80 = vmatpush1.msra.mxu0 %v35
    %81 = vmatprep.subr.mxu0 0.0
    %82 = vmatpush1.msra.mxu0 0.0
    %83 = vmatprep.subr.mxu0 0.0
    %84 = vmatpush1.msra.mxu0 0.0
    %85 = vmatprep.subr.mxu0 0.0
    %86 = vmatpush1.msra.mxu0 0.0
    %87 = vmatprep.subr.mxu0 0.0
    %88 = vmatpush1.msra.mxu0 0.0
    %89 = vmatprep.subr.mxu0 0.0
    %90 = vmatpush1.msra.mxu0 0.0
    %91 = vmatprep.subr.mxu0 0.0
    %92 = vmatpush1.msra.mxu0 0.0
    %93 = vmatprep.subr.mxu0 0.0
    %94 = vmatpush1.msra.mxu0 0.0
    %95 = vmatprep.subr.mxu0 0.0
    %96 = vmatpush1.msra.mxu0 0.0
    %97 = vmatprep.subr.mxu0 0.0
    %98 = vmatpush1.msra.mxu0 0.0
    %99 = vmatprep.subr.mxu0 0.0
    %100 = vmatpush1.msra.mxu0 0.0
    %101 = vmatprep.subr.mxu0 0.0
    %102 = vmatpush1.msra.mxu0 0.0
    %103 = vmatprep.subr.mxu0 0.0
    %104 = vmatpush1.msra.mxu0 0.0
    %105 = vmatprep.subr.mxu0 0.0
    %106 = vmatpush1.msra.mxu0 0.0
    %107 = vmatprep.subr.mxu0 0.0
    %108 = vmatpush1.msra.mxu0 0.0
    %109 = vmatprep.subr.mxu0 0.0
    %110 = vmatpush1.msra.mxu0 0.0
    %111 = vmatprep.subr.mxu0 0.0
    %112 = vmatpush1.msra.mxu0 0.0
    %113 = vmatprep.subr.mxu0 0.0
    %114 = vmatpush1.msra.mxu0 0.0
    %115 = vmatprep.subr.mxu0 0.0
    %116 = vmatpush1.msra.mxu0 0.0
    %117 = vmatprep.subr.mxu0 0.0
    %118 = vmatpush1.msra.mxu0 0.0
    %119 = vmatprep.subr.mxu0 0.0
    %120 = vmatpush1.msra.mxu0 0.0
    %121 = vmatprep.subr.mxu0 0.0
    %122 = vmatpush1.msra.mxu0 0.0
    %123 = vmatprep.subr.mxu0 0.0
    %124 = vmatpush1.msra.mxu0 0.0
    %125 = vmatprep.subr.mxu0 0.0
    %126 = vmatpush1.msra.mxu0 0.0
    %127 = vmatprep.subr.mxu0 0.0
    %128 = vmatpush1.msra.mxu0 0.0
    %129 = vmatprep.subr.mxu0 0.0
    %130 = vmatpush1.msra.mxu0 0.0
    %131 = vmatprep.subr.mxu0 0.0
    %132 = vmatpush1.msra.mxu0 0.0
    %133 = vmatprep.subr.mxu0 0.0
    %134 = vmatpush1.msra.mxu0 0.0
    %135 = vmatprep.subr.mxu0 0.0
    %136 = vmatpush1.msra.mxu0 0.0
    %137 = vmatprep.subr.mxu0 0.0
    %138 = vmatpush1.msra.mxu0 0.0
    %139 = vmatprep.subr.mxu0 0.0
    %140 = vmatpush1.msra.mxu0 0.0
    %141 = vmatprep.mubr.f32.mxu0 0.0
    %142 = vmatmul.mubr.f32.gmra.mrb[0].mxu0 %v51
    %v143 = vpop.f32.mrb[0].mxu0
    %v144 = vadd.f32 %v42, %v143
    %v145 = vpop.f32.mrb[0].mxu0
    %v146 = vadd.f32 %v46, %v145
    %147 = vmatprep.mubr.f32.mxu0 0.0
    %148 = vmatmul.mubr.f32.gmra.mrb[0].mxu0 %v54
    %v149 = vpop.f32.mrb[0].mxu0
    %v150 = vadd.f32 %v42, %v149
    %v151 = vpop.f32.mrb[0].mxu0
    %v152 = vadd.f32 %v46, %v151
    %153 = vmatprep.mubr.f32.mxu0 0.0
    %154 = vmatmul.mubr.f32.gmra.mrb[0].mxu0 %v57
    %v155 = vpop.f32.mrb[0].mxu0
    %v156 = vadd.f32 %v42, %v155
    %v157 = vpop.f32.mrb[0].mxu0
    %v158 = vadd.f32 %v46, %v157
    %159 = vmatprep.mubr.f32.mxu0 0.0
    %160 = vmatmul.mubr.f32.gmra.mrb[0].mxu0 %v60
    %v161 = vpop.f32.mrb[0].mxu0
    %v162 = vadd.f32 %v42, %v161
    %v163 = vpop.f32.mrb[0].mxu0
    %v164 = vadd.f32 %v46, %v163
    %165 = vmatprep.mubr.f32.mxu0 0.0
    %166 = vmatmul.mubr.f32.gmra.mrb[0].mxu0 %v63
    %v167 = vpop.f32.mrb[0].mxu0
    %v168 = vadd.f32 %v42, %v167
    %v169 = vpop.f32.mrb[0].mxu0
    %v170 = vadd.f32 %v46, %v169
    %171 = vmatprep.mubr.f32.mxu0 0.0
    %172 = vmatmul.mubr.f32.gmra.mrb[0].mxu0 %v66
    %v173 = vpop.f32.mrb[0].mxu0
    %v174 = vadd.f32 %v42, %v173
    %v175 = vpop.f32.mrb[0].mxu0
    %v176 = vadd.f32 %v46, %v175
    %177 = vmatprep.mubr.f32.mxu0 0.0
    %178 = vmatmul.mubr.f32.gmra.mrb[0].mxu0 %v69
    %v179 = vpop.f32.mrb[0].mxu0
    %v180 = vadd.f32 %v42, %v179
    %v181 = vpop.f32.mrb[0].mxu0
    %v182 = vadd.f32 %v46, %v181
    %183 = vmatprep.mubr.f32.mxu0 0.0
    %184 = vmatmul.mubr.f32.gmra.mrb[0].mxu0 %v72
    %v185 = vpop.f32.mrb[0].mxu0
    %v186 = vadd.f32 %v42, %v185
    %v187 = vpop.f32.mrb[0].mxu0
    %v188 = vadd.f32 %v46, %v187
    %189 = vmatprep.mubr.f32.mxu0 0.0
    %190 = vmatmul.mubr.f32.gmra.mrb[0].mxu0 %v75
    %v191 = vpop.f32.mrb[0].mxu0
    %v192 = vadd.f32 %v42, %v191
    %v193 = vpop.f32.mrb[0].mxu0
    %v194 = vadd.f32 %v46, %v193
    %195 = vdwg.mxu0
    %v196 = vld [vmem:[%s3] sm:$0xff]
    %v197 = vld [vmem:[%s3 + $0x8] sm:$0xff]
    %v198 = vld [vmem:[%s3 + $0x10] sm:$0xff]
    %v199 = vld [vmem:[%s3 + $0x18] sm:$0xff]
    %v200 = vld [vmem:[%s3 + $0x20] sm:$0xff]
    %v201 = vld [vmem:[%s3 + $0x28] sm:$0xff]
    %v202 = vld [vmem:[%s3 + $0x30] sm:$0xff]
    %v203 = vld [vmem:[%s3 + $0x38] sm:$0xff]
    %v204 = vld [vmem:[%s3 + $0x40] sm:$0xff]
    %v205 = vld [vmem:[%s3 + $0x48] sm:$0xff]
    %v206 = vld [vmem:[%s3 + $0x50] sm:$0xff]
    %v207 = vld [vmem:[%s3 + $0x58] sm:$0xff]
    %v208 = vld [vmem:[%s3 + $0x60] sm:$0xff]
    %v209 = vld [vmem:[%s3 + $0x68] sm:$0xff]
    %v210 = vld [vmem:[%s3 + $0x70] sm:$0xff]
    %v211 = vld [vmem:[%s3 + $0x78] sm:$0xff]
    %v212 = vxor.u32 %v144, 2147483648
    %v213 = vxor.u32 %v146, 2147483648
    %v214 = vmul.f32 %v212, 1.442695
    %v215 = vpow.pop %v214
    %v216 = vmul.f32 %v213, 1.442695
    %v217 = vpow.pop %v216
    %v218 = vadd.f32 %v215, 1.0
    %v219 = vadd.f32 %v217, 1.0
    %v220 = vrcp.pop %v218
    %v221 = vmul.f32 1.0, %v220
    %v222 = vrcp.pop %v219
    %v223 = vmul.f32 1.0, %v222
    %v224 = vmul.f32 %v223, 2.0
    %v225 = vsub.f32 %v224, 1.0
    %v226 = vlaneseq
    %v227 = vand.u32 %v226, 127
    %vm228 = vcmp.lt.s32.totalorder %v227, 32
    %v229 = vsel %vm228, 1, 0
    %v230 = vcvt.s32.f32 %v229
    %v231 = vmul.f32 %v221, %v225
    %v232 = vmul.f32 %v231, %v230
    %v233 = vtanh.pop %v232
    %235 = vrot.lane.b32.xlu0 %v233, 64
    %v236 = vpop.permute.xlu0 %235
    %v238 = vmul.f32 %v223, %v236
    %240 = vrot.lane.b32.xlu0 %v238, 64
    %v241 = vpop.permute.xlu0 %240
    %vm242 = vcmask 523264
    %v243 = vsel %vm242, %v241, 0
    %245 = vmatprep.subr.mxu0 %v197
    %246 = vmatpush1.msra.mxu0 %v196
    %247 = vmatprep.subr.mxu0 %v199
    %248 = vmatpush1.msra.mxu0 %v198
    %249 = vmatprep.subr.mxu0 %v201
    %250 = vmatpush1.msra.mxu0 %v200
    %251 = vmatprep.subr.mxu0 %v203
    %252 = vmatpush1.msra.mxu0 %v202
    %253 = vmatprep.subr.mxu0 %v205
    %254 = vmatpush1.msra.mxu0 %v204
    %255 = vmatprep.subr.mxu0 %v207
    %256 = vmatpush1.msra.mxu0 %v206
    %257 = vmatprep.subr.mxu0 %v209
    %258 = vmatpush1.msra.mxu0 %v208
    %259 = vmatprep.subr.mxu0 %v211
    %260 = vmatpush1.msra.mxu0 %v210
    %261 = vmatprep.subr.mxu0 0.0
    %262 = vmatpush1.msra.mxu0 0.0
    %263 = vmatprep.subr.mxu0 0.0
    %264 = vmatpush1.msra.mxu0 0.0
    %265 = vmatprep.subr.mxu0 0.0
    %266 = vmatpush1.msra.mxu0 0.0
    %267 = vmatprep.subr.mxu0 0.0
    %268 = vmatpush1.msra.mxu0 0.0
    %269 = vmatprep.subr.mxu0 0.0
    %270 = vmatpush1.msra.mxu0 0.0
    %271 = vmatprep.subr.mxu0 0.0
    %272 = vmatpush1.msra.mxu0 0.0
    %273 = vmatprep.subr.mxu0 0.0
    %274 = vmatpush1.msra.mxu0 0.0
    %275 = vmatprep.subr.mxu0 0.0
    %276 = vmatpush1.msra.mxu0 0.0
    %277 = vmatprep.subr.mxu0 0.0
    %278 = vmatpush1.msra.mxu0 0.0
    %279 = vmatprep.subr.mxu0 0.0
    %280 = vmatpush1.msra.mxu0 0.0
    %281 = vmatprep.subr.mxu0 0.0
    %282 = vmatpush1.msra.mxu0 0.0
    %283 = vmatprep.subr.mxu0 0.0
    %284 = vmatpush1.msra.mxu0 0.0
    %285 = vmatprep.subr.mxu0 0.0
    %286 = vmatpush1.msra.mxu0 0.0
    %287 = vmatprep.subr.mxu0 0.0
    %288 = vmatpush1.msra.mxu0 0.0
    %289 = vmatprep.subr.mxu0 0.0
    %290 = vmatpush1.msra.mxu0 0.0
    %291 = vmatprep.subr.mxu0 0.0
    %292 = vmatpush1.msra.mxu0 0.0
    %293 = vmatprep.subr.mxu0 0.0
    %294 = vmatpush1.msra.mxu0 0.0
    %295 = vmatprep.subr.mxu0 0.0
    %296 = vmatpush1.msra.mxu0 0.0
    %297 = vmatprep.subr.mxu0 0.0
    %298 = vmatpush1.msra.mxu0 0.0
    %299 = vmatprep.subr.mxu0 0.0
    %300 = vmatpush1.msra.mxu0 0.0
    %301 = vmatprep.subr.mxu0 0.0
    %302 = vmatpush1.msra.mxu0 0.0
    %303 = vmatprep.subr.mxu0 0.0
    %304 = vmatpush1.msra.mxu0 0.0
    %305 = vmatprep.subr.mxu0 0.0
    %306 = vmatpush1.msra.mxu0 0.0
    %307 = vmatprep.subr.mxu0 0.0
    %308 = vmatpush1.msra.mxu0 0.0
    %309 = vmatprep.mubr.f32.mxu0 0.0
    %310 = vmatmul.mubr.f32.gmra.mrb[0].mxu0 %v243
    %v311 = vpop.f32.mrb[0].mxu0
    %v312 = vadd.f32 0.0, %v311
    %v313 = vpop.f32.mrb[0].mxu0
    %v314 = vadd.f32 0.0, %v313
    %315 = vdwg.mxu0
    %v316 = vadd.f32 %v150, %v312
    %v317 = vadd.f32 %v152, %v314
    %v318 = vxor.u32 %v316, 2147483648
    %v319 = vxor.u32 %v317, 2147483648
    %v320 = vmul.f32 %v318, 1.442695
    %v321 = vpow.pop %v320
    %v322 = vmul.f32 %v319, 1.442695
    %v323 = vpow.pop %v322
    %v324 = vadd.f32 %v321, 1.0
    %v325 = vadd.f32 %v323, 1.0
    %v326 = vrcp.pop %v324
    %v327 = vmul.f32 1.0, %v326
    %v328 = vrcp.pop %v325
    %v329 = vmul.f32 1.0, %v328
    %v330 = vmul.f32 %v329, 2.0
    %v331 = vsub.f32 %v330, 1.0
    %333 = vrot.lane.b32.xlu0 %v232, 64
    %v334 = vpop.permute.xlu0 %333
    %v336 = vmul.f32 %v327, %v334
    %v337 = vmul.f32 %v327, %v331
    %339 = vrot.lane.b32.xlu0 %v337, 64
    %v340 = vpop.permute.xlu0 %339
    %v342 = vadd.f32 %v336, %v340
    %v343 = vtanh.pop %v342
    %v344 = vmul.f32 %v329, %v343
    %346 = vrot.lane.b32.xlu0 %v344, 64
    %v347 = vpop.permute.xlu0 %346
    %v348 = vsel %vm242, %v347, 0
    %350 = vmatprep.subr.mxu0 %v197
    %351 = vmatpush1.msra.mxu0 %v196
    %352 = vmatprep.subr.mxu0 %v199
    %353 = vmatpush1.msra.mxu0 %v198
    %354 = vmatprep.subr.mxu0 %v201
    %355 = vmatpush1.msra.mxu0 %v200
    %356 = vmatprep.subr.mxu0 %v203
    %357 = vmatpush1.msra.mxu0 %v202
    %358 = vmatprep.subr.mxu0 %v205
    %359 = vmatpush1.msra.mxu0 %v204
    %360 = vmatprep.subr.mxu0 %v207
    %361 = vmatpush1.msra.mxu0 %v206
    %362 = vmatprep.subr.mxu0 %v209
    %363 = vmatpush1.msra.mxu0 %v208
    %364 = vmatprep.subr.mxu0 %v211
    %365 = vmatpush1.msra.mxu0 %v210
    %366 = vmatprep.subr.mxu0 0.0
    %367 = vmatpush1.msra.mxu0 0.0
    %368 = vmatprep.subr.mxu0 0.0
    %369 = vmatpush1.msra.mxu0 0.0
    %370 = vmatprep.subr.mxu0 0.0
    %371 = vmatpush1.msra.mxu0 0.0
    %372 = vmatprep.subr.mxu0 0.0
    %373 = vmatpush1.msra.mxu0 0.0
    %374 = vmatprep.subr.mxu0 0.0
    %375 = vmatpush1.msra.mxu0 0.0
    %376 = vmatprep.subr.mxu0 0.0
    %377 = vmatpush1.msra.mxu0 0.0
    %378 = vmatprep.subr.mxu0 0.0
    %379 = vmatpush1.msra.mxu0 0.0
    %380 = vmatprep.subr.mxu0 0.0
    %381 = vmatpush1.msra.mxu0 0.0
    %382 = vmatprep.subr.mxu0 0.0
    %383 = vmatpush1.msra.mxu0 0.0
    %384 = vmatprep.subr.mxu0 0.0
    %385 = vmatpush1.msra.mxu0 0.0
    %386 = vmatprep.subr.mxu0 0.0
    %387 = vmatpush1.msra.mxu0 0.0
    %388 = vmatprep.subr.mxu0 0.0
    %389 = vmatpush1.msra.mxu0 0.0
    %390 = vmatprep.subr.mxu0 0.0
    %391 = vmatpush1.msra.mxu0 0.0
    %392 = vmatprep.subr.mxu0 0.0
    %393 = vmatpush1.msra.mxu0 0.0
    %394 = vmatprep.subr.mxu0 0.0
    %395 = vmatpush1.msra.mxu0 0.0
    %396 = vmatprep.subr.mxu0 0.0
    %397 = vmatpush1.msra.mxu0 0.0
    %398 = vmatprep.subr.mxu0 0.0
    %399 = vmatpush1.msra.mxu0 0.0
    %400 = vmatprep.subr.mxu0 0.0
    %401 = vmatpush1.msra.mxu0 0.0
    %402 = vmatprep.subr.mxu0 0.0
    %403 = vmatpush1.msra.mxu0 0.0
    %404 = vmatprep.subr.mxu0 0.0
    %405 = vmatpush1.msra.mxu0 0.0
    %406 = vmatprep.subr.mxu0 0.0
    %407 = vmatpush1.msra.mxu0 0.0
    %408 = vmatprep.subr.mxu0 0.0
    %409 = vmatpush1.msra.mxu0 0.0
    %410 = vmatprep.subr.mxu0 0.0
    %411 = vmatpush1.msra.mxu0 0.0
    %412 = vmatprep.subr.mxu0 0.0
    %413 = vmatpush1.msra.mxu0 0.0
    %414 = vmatprep.mubr.f32.mxu0 0.0
    %415 = vmatmul.mubr.f32.gmra.mrb[0].mxu0 %v348
    %v416 = vpop.f32.mrb[0].mxu0
    %v417 = vadd.f32 0.0, %v416
    %v418 = vpop.f32.mrb[0].mxu0
    %v419 = vadd.f32 0.0, %v418
    %420 = vdwg.mxu0
    %v421 = vadd.f32 %v156, %v417
    %v422 = vadd.f32 %v158, %v419
    %v423 = vxor.u32 %v421, 2147483648
    %v424 = vxor.u32 %v422, 2147483648
    %v425 = vmul.f32 %v423, 1.442695
    %v426 = vpow.pop %v425
    %v427 = vmul.f32 %v424, 1.442695
    %v428 = vpow.pop %v427
    %v429 = vadd.f32 %v426, 1.0
    %v430 = vadd.f32 %v428, 1.0
    %v431 = vrcp.pop %v429
    %v432 = vmul.f32 1.0, %v431
    %v433 = vrcp.pop %v430
    %v434 = vmul.f32 1.0, %v433
    %v435 = vmul.f32 %v434, 2.0
    %v436 = vsub.f32 %v435, 1.0
    %v437 = vmul.f32 %v432, %v342
    %v438 = vmul.f32 %v432, %v436
    %440 = vrot.lane.b32.xlu0 %v438, 64
    %v441 = vpop.permute.xlu0 %440
    %v443 = vadd.f32 %v437, %v441
    %v444 = vtanh.pop %v443
    %v445 = vmul.f32 %v434, %v444
    %447 = vrot.lane.b32.xlu0 %v445, 64
    %v448 = vpop.permute.xlu0 %447
    %v449 = vsel %vm242, %v448, 0
    %451 = vmatprep.subr.mxu0 %v197
    %452 = vmatpush1.msra.mxu0 %v196
    %453 = vmatprep.subr.mxu0 %v199
    %454 = vmatpush1.msra.mxu0 %v198
    %455 = vmatprep.subr.mxu0 %v201
    %456 = vmatpush1.msra.mxu0 %v200
    %457 = vmatprep.subr.mxu0 %v203
    %458 = vmatpush1.msra.mxu0 %v202
    %459 = vmatprep.subr.mxu0 %v205
    %460 = vmatpush1.msra.mxu0 %v204
    %461 = vmatprep.subr.mxu0 %v207
    %462 = vmatpush1.msra.mxu0 %v206
    %463 = vmatprep.subr.mxu0 %v209
    %464 = vmatpush1.msra.mxu0 %v208
    %465 = vmatprep.subr.mxu0 %v211
    %466 = vmatpush1.msra.mxu0 %v210
    %467 = vmatprep.subr.mxu0 0.0
    %468 = vmatpush1.msra.mxu0 0.0
    %469 = vmatprep.subr.mxu0 0.0
    %470 = vmatpush1.msra.mxu0 0.0
    %471 = vmatprep.subr.mxu0 0.0
    %472 = vmatpush1.msra.mxu0 0.0
    %473 = vmatprep.subr.mxu0 0.0
    %474 = vmatpush1.msra.mxu0 0.0
    %475 = vmatprep.subr.mxu0 0.0
    %476 = vmatpush1.msra.mxu0 0.0
    %477 = vmatprep.subr.mxu0 0.0
    %478 = vmatpush1.msra.mxu0 0.0
    %479 = vmatprep.subr.mxu0 0.0
    %480 = vmatpush1.msra.mxu0 0.0
    %481 = vmatprep.subr.mxu0 0.0
    %482 = vmatpush1.msra.mxu0 0.0
    %483 = vmatprep.subr.mxu0 0.0
    %484 = vmatpush1.msra.mxu0 0.0
    %485 = vmatprep.subr.mxu0 0.0
    %486 = vmatpush1.msra.mxu0 0.0
    %487 = vmatprep.subr.mxu0 0.0
    %488 = vmatpush1.msra.mxu0 0.0
    %489 = vmatprep.subr.mxu0 0.0
    %490 = vmatpush1.msra.mxu0 0.0
    %491 = vmatprep.subr.mxu0 0.0
    %492 = vmatpush1.msra.mxu0 0.0
    %493 = vmatprep.subr.mxu0 0.0
    %494 = vmatpush1.msra.mxu0 0.0
    %495 = vmatprep.subr.mxu0 0.0
    %496 = vmatpush1.msra.mxu0 0.0
    %497 = vmatprep.subr.mxu0 0.0
    %498 = vmatpush1.msra.mxu0 0.0
    %499 = vmatprep.subr.mxu0 0.0
    %500 = vmatpush1.msra.mxu0 0.0
    %501 = vmatprep.subr.mxu0 0.0
    %502 = vmatpush1.msra.mxu0 0.0
    %503 = vmatprep.subr.mxu0 0.0
    %504 = vmatpush1.msra.mxu0 0.0
    %505 = vmatprep.subr.mxu0 0.0
    %506 = vmatpush1.msra.mxu0 0.0
    %507 = vmatprep.subr.mxu0 0.0
    %508 = vmatpush1.msra.mxu0 0.0
    %509 = vmatprep.subr.mxu0 0.0
    %510 = vmatpush1.msra.mxu0 0.0
    %511 = vmatprep.subr.mxu0 0.0
    %512 = vmatpush1.msra.mxu0 0.0
    %513 = vmatprep.subr.mxu0 0.0
    %514 = vmatpush1.msra.mxu0 0.0
    %515 = vmatprep.mubr.f32.mxu0 0.0
    %516 = vmatmul.mubr.f32.gmra.mrb[0].mxu0 %v449
    %v517 = vpop.f32.mrb[0].mxu0
    %v518 = vadd.f32 0.0, %v517
    %v519 = vpop.f32.mrb[0].mxu0
    %v520 = vadd.f32 0.0, %v519
    %521 = vdwg.mxu0
    %v522 = vadd.f32 %v162, %v518
    %v523 = vadd.f32 %v164, %v520
    %v524 = vxor.u32 %v522, 2147483648
    %v525 = vxor.u32 %v523, 2147483648
    %v526 = vmul.f32 %v524, 1.442695
    %v527 = vpow.pop %v526
    %v528 = vmul.f32 %v525, 1.442695
    %v529 = vpow.pop %v528
    %v530 = vadd.f32 %v527, 1.0
    %v531 = vadd.f32 %v529, 1.0
    %v532 = vrcp.pop %v530
    %v533 = vmul.f32 1.0, %v532
    %v534 = vrcp.pop %v531
    %v535 = vmul.f32 1.0, %v534
    %v536 = vmul.f32 %v535, 2.0
    %v537 = vsub.f32 %v536, 1.0
    %v538 = vmul.f32 %v533, %v443
    %v539 = vmul.f32 %v533, %v537
    %541 = vrot.lane.b32.xlu0 %v539, 64
    %v542 = vpop.permute.xlu0 %541
    %v544 = vadd.f32 %v538, %v542
    %v545 = vtanh.pop %v544
    %v546 = vmul.f32 %v535, %v545
    %548 = vrot.lane.b32.xlu0 %v546, 64
    %v549 = vpop.permute.xlu0 %548
    %v550 = vsel %vm242, %v549, 0
    %552 = vmatprep.subr.mxu0 %v197
    %553 = vmatpush1.msra.mxu0 %v196
    %554 = vmatprep.subr.mxu0 %v199
    %555 = vmatpush1.msra.mxu0 %v198
    %556 = vmatprep.subr.mxu0 %v201
    %557 = vmatpush1.msra.mxu0 %v200
    %558 = vmatprep.subr.mxu0 %v203
    %559 = vmatpush1.msra.mxu0 %v202
    %560 = vmatprep.subr.mxu0 %v205
    %561 = vmatpush1.msra.mxu0 %v204
    %562 = vmatprep.subr.mxu0 %v207
    %563 = vmatpush1.msra.mxu0 %v206
    %564 = vmatprep.subr.mxu0 %v209
    %565 = vmatpush1.msra.mxu0 %v208
    %566 = vmatprep.subr.mxu0 %v211
    %567 = vmatpush1.msra.mxu0 %v210
    %568 = vmatprep.subr.mxu0 0.0
    %569 = vmatpush1.msra.mxu0 0.0
    %570 = vmatprep.subr.mxu0 0.0
    %571 = vmatpush1.msra.mxu0 0.0
    %572 = vmatprep.subr.mxu0 0.0
    %573 = vmatpush1.msra.mxu0 0.0
    %574 = vmatprep.subr.mxu0 0.0
    %575 = vmatpush1.msra.mxu0 0.0
    %576 = vmatprep.subr.mxu0 0.0
    %577 = vmatpush1.msra.mxu0 0.0
    %578 = vmatprep.subr.mxu0 0.0
    %579 = vmatpush1.msra.mxu0 0.0
    %580 = vmatprep.subr.mxu0 0.0
    %581 = vmatpush1.msra.mxu0 0.0
    %582 = vmatprep.subr.mxu0 0.0
    %583 = vmatpush1.msra.mxu0 0.0
    %584 = vmatprep.subr.mxu0 0.0
    %585 = vmatpush1.msra.mxu0 0.0
    %586 = vmatprep.subr.mxu0 0.0
    %587 = vmatpush1.msra.mxu0 0.0
    %588 = vmatprep.subr.mxu0 0.0
    %589 = vmatpush1.msra.mxu0 0.0
    %590 = vmatprep.subr.mxu0 0.0
    %591 = vmatpush1.msra.mxu0 0.0
    %592 = vmatprep.subr.mxu0 0.0
    %593 = vmatpush1.msra.mxu0 0.0
    %594 = vmatprep.subr.mxu0 0.0
    %595 = vmatpush1.msra.mxu0 0.0
    %596 = vmatprep.subr.mxu0 0.0
    %597 = vmatpush1.msra.mxu0 0.0
    %598 = vmatprep.subr.mxu0 0.0
    %599 = vmatpush1.msra.mxu0 0.0
    %600 = vmatprep.subr.mxu0 0.0
    %601 = vmatpush1.msra.mxu0 0.0
    %602 = vmatprep.subr.mxu0 0.0
    %603 = vmatpush1.msra.mxu0 0.0
    %604 = vmatprep.subr.mxu0 0.0
    %605 = vmatpush1.msra.mxu0 0.0
    %606 = vmatprep.subr.mxu0 0.0
    %607 = vmatpush1.msra.mxu0 0.0
    %608 = vmatprep.subr.mxu0 0.0
    %609 = vmatpush1.msra.mxu0 0.0
    %610 = vmatprep.subr.mxu0 0.0
    %611 = vmatpush1.msra.mxu0 0.0
    %612 = vmatprep.subr.mxu0 0.0
    %613 = vmatpush1.msra.mxu0 0.0
    %614 = vmatprep.subr.mxu0 0.0
    %615 = vmatpush1.msra.mxu0 0.0
    %616 = vmatprep.mubr.f32.mxu0 0.0
    %617 = vmatmul.mubr.f32.gmra.mrb[0].mxu0 %v550
    %v618 = vpop.f32.mrb[0].mxu0
    %v619 = vadd.f32 0.0, %v618
    %v620 = vpop.f32.mrb[0].mxu0
    %v621 = vadd.f32 0.0, %v620
    %622 = vdwg.mxu0
    %v623 = vadd.f32 %v168, %v619
    %v624 = vadd.f32 %v170, %v621
    %v625 = vxor.u32 %v623, 2147483648
    %v626 = vxor.u32 %v624, 2147483648
    %v627 = vmul.f32 %v625, 1.442695
    %v628 = vpow.pop %v627
    %v629 = vmul.f32 %v626, 1.442695
    %v630 = vpow.pop %v629
    %v631 = vadd.f32 %v628, 1.0
    %v632 = vadd.f32 %v630, 1.0
    %v633 = vrcp.pop %v631
    %v634 = vmul.f32 1.0, %v633
    %v635 = vrcp.pop %v632
    %v636 = vmul.f32 1.0, %v635
    %v637 = vmul.f32 %v636, 2.0
    %v638 = vsub.f32 %v637, 1.0
    %v639 = vmul.f32 %v634, %v544
    %v640 = vmul.f32 %v634, %v638
    %642 = vrot.lane.b32.xlu0 %v640, 64
    %v643 = vpop.permute.xlu0 %642
    %v645 = vadd.f32 %v639, %v643
    %v646 = vtanh.pop %v645
    %v647 = vmul.f32 %v636, %v646
    %649 = vrot.lane.b32.xlu0 %v647, 64
    %v650 = vpop.permute.xlu0 %649
    %v651 = vsel %vm242, %v650, 0
    %653 = vmatprep.subr.mxu0 %v197
    %654 = vmatpush1.msra.mxu0 %v196
    %655 = vmatprep.subr.mxu0 %v199
    %656 = vmatpush1.msra.mxu0 %v198
    %657 = vmatprep.subr.mxu0 %v201
    %658 = vmatpush1.msra.mxu0 %v200
    %659 = vmatprep.subr.mxu0 %v203
    %660 = vmatpush1.msra.mxu0 %v202
    %661 = vmatprep.subr.mxu0 %v205
    %662 = vmatpush1.msra.mxu0 %v204
    %663 = vmatprep.subr.mxu0 %v207
    %664 = vmatpush1.msra.mxu0 %v206
    %665 = vmatprep.subr.mxu0 %v209
    %666 = vmatpush1.msra.mxu0 %v208
    %667 = vmatprep.subr.mxu0 %v211
    %668 = vmatpush1.msra.mxu0 %v210
    %669 = vmatprep.subr.mxu0 0.0
    %670 = vmatpush1.msra.mxu0 0.0
    %671 = vmatprep.subr.mxu0 0.0
    %672 = vmatpush1.msra.mxu0 0.0
    %673 = vmatprep.subr.mxu0 0.0
    %674 = vmatpush1.msra.mxu0 0.0
    %675 = vmatprep.subr.mxu0 0.0
    %676 = vmatpush1.msra.mxu0 0.0
    %677 = vmatprep.subr.mxu0 0.0
    %678 = vmatpush1.msra.mxu0 0.0
    %679 = vmatprep.subr.mxu0 0.0
    %680 = vmatpush1.msra.mxu0 0.0
    %681 = vmatprep.subr.mxu0 0.0
    %682 = vmatpush1.msra.mxu0 0.0
    %683 = vmatprep.subr.mxu0 0.0
    %684 = vmatpush1.msra.mxu0 0.0
    %685 = vmatprep.subr.mxu0 0.0
    %686 = vmatpush1.msra.mxu0 0.0
    %687 = vmatprep.subr.mxu0 0.0
    %688 = vmatpush1.msra.mxu0 0.0
    %689 = vmatprep.subr.mxu0 0.0
    %690 = vmatpush1.msra.mxu0 0.0
    %691 = vmatprep.subr.mxu0 0.0
    %692 = vmatpush1.msra.mxu0 0.0
    %693 = vmatprep.subr.mxu0 0.0
    %694 = vmatpush1.msra.mxu0 0.0
    %695 = vmatprep.subr.mxu0 0.0
    %696 = vmatpush1.msra.mxu0 0.0
    %697 = vmatprep.subr.mxu0 0.0
    %698 = vmatpush1.msra.mxu0 0.0
    %699 = vmatprep.subr.mxu0 0.0
    %700 = vmatpush1.msra.mxu0 0.0
    %701 = vmatprep.subr.mxu0 0.0
    %702 = vmatpush1.msra.mxu0 0.0
    %703 = vmatprep.subr.mxu0 0.0
    %704 = vmatpush1.msra.mxu0 0.0
    %705 = vmatprep.subr.mxu0 0.0
    %706 = vmatpush1.msra.mxu0 0.0
    %707 = vmatprep.subr.mxu0 0.0
    %708 = vmatpush1.msra.mxu0 0.0
    %709 = vmatprep.subr.mxu0 0.0
    %710 = vmatpush1.msra.mxu0 0.0
    %711 = vmatprep.subr.mxu0 0.0
    %712 = vmatpush1.msra.mxu0 0.0
    %713 = vmatprep.subr.mxu0 0.0
    %714 = vmatpush1.msra.mxu0 0.0
    %715 = vmatprep.subr.mxu0 0.0
    %716 = vmatpush1.msra.mxu0 0.0
    %717 = vmatprep.mubr.f32.mxu0 0.0
    %718 = vmatmul.mubr.f32.gmra.mrb[0].mxu0 %v651
    %v719 = vpop.f32.mrb[0].mxu0
    %v720 = vadd.f32 0.0, %v719
    %v721 = vpop.f32.mrb[0].mxu0
    %v722 = vadd.f32 0.0, %v721
    %723 = vdwg.mxu0
    %v724 = vadd.f32 %v174, %v720
    %v725 = vadd.f32 %v176, %v722
    %v726 = vxor.u32 %v724, 2147483648
    %v727 = vxor.u32 %v725, 2147483648
    %v728 = vmul.f32 %v726, 1.442695
    %v729 = vpow.pop %v728
    %v730 = vmul.f32 %v727, 1.442695
    %v731 = vpow.pop %v730
    %v732 = vadd.f32 %v729, 1.0
    %v733 = vadd.f32 %v731, 1.0
    %v734 = vrcp.pop %v732
    %v735 = vmul.f32 1.0, %v734
    %v736 = vrcp.pop %v733
    %v737 = vmul.f32 1.0, %v736
    %v738 = vmul.f32 %v737, 2.0
    %v739 = vsub.f32 %v738, 1.0
    %v740 = vmul.f32 %v735, %v645
    %v741 = vmul.f32 %v735, %v739
    %743 = vrot.lane.b32.xlu0 %v741, 64
    %v744 = vpop.permute.xlu0 %743
    %v746 = vadd.f32 %v740, %v744
    %v747 = vtanh.pop %v746
    %v748 = vmul.f32 %v737, %v747
    %750 = vrot.lane.b32.xlu0 %v748, 64
    %v751 = vpop.permute.xlu0 %750
    %v752 = vsel %vm242, %v751, 0
    %754 = vmatprep.subr.mxu0 %v197
    %755 = vmatpush1.msra.mxu0 %v196
    %756 = vmatprep.subr.mxu0 %v199
    %757 = vmatpush1.msra.mxu0 %v198
    %758 = vmatprep.subr.mxu0 %v201
    %759 = vmatpush1.msra.mxu0 %v200
    %760 = vmatprep.subr.mxu0 %v203
    %761 = vmatpush1.msra.mxu0 %v202
    %762 = vmatprep.subr.mxu0 %v205
    %763 = vmatpush1.msra.mxu0 %v204
    %764 = vmatprep.subr.mxu0 %v207
    %765 = vmatpush1.msra.mxu0 %v206
    %766 = vmatprep.subr.mxu0 %v209
    %767 = vmatpush1.msra.mxu0 %v208
    %768 = vmatprep.subr.mxu0 %v211
    %769 = vmatpush1.msra.mxu0 %v210
    %770 = vmatprep.subr.mxu0 0.0
    %771 = vmatpush1.msra.mxu0 0.0
    %772 = vmatprep.subr.mxu0 0.0
    %773 = vmatpush1.msra.mxu0 0.0
    %774 = vmatprep.subr.mxu0 0.0
    %775 = vmatpush1.msra.mxu0 0.0
    %776 = vmatprep.subr.mxu0 0.0
    %777 = vmatpush1.msra.mxu0 0.0
    %778 = vmatprep.subr.mxu0 0.0
    %779 = vmatpush1.msra.mxu0 0.0
    %780 = vmatprep.subr.mxu0 0.0
    %781 = vmatpush1.msra.mxu0 0.0
    %782 = vmatprep.subr.mxu0 0.0
    %783 = vmatpush1.msra.mxu0 0.0
    %784 = vmatprep.subr.mxu0 0.0
    %785 = vmatpush1.msra.mxu0 0.0
    %786 = vmatprep.subr.mxu0 0.0
    %787 = vmatpush1.msra.mxu0 0.0
    %788 = vmatprep.subr.mxu0 0.0
    %789 = vmatpush1.msra.mxu0 0.0
    %790 = vmatprep.subr.mxu0 0.0
    %791 = vmatpush1.msra.mxu0 0.0
    %792 = vmatprep.subr.mxu0 0.0
    %793 = vmatpush1.msra.mxu0 0.0
    %794 = vmatprep.subr.mxu0 0.0
    %795 = vmatpush1.msra.mxu0 0.0
    %796 = vmatprep.subr.mxu0 0.0
    %797 = vmatpush1.msra.mxu0 0.0
    %798 = vmatprep.subr.mxu0 0.0
    %799 = vmatpush1.msra.mxu0 0.0
    %800 = vmatprep.subr.mxu0 0.0
    %801 = vmatpush1.msra.mxu0 0.0
    %802 = vmatprep.subr.mxu0 0.0
    %803 = vmatpush1.msra.mxu0 0.0
    %804 = vmatprep.subr.mxu0 0.0
    %805 = vmatpush1.msra.mxu0 0.0
    %806 = vmatprep.subr.mxu0 0.0
    %807 = vmatpush1.msra.mxu0 0.0
    %808 = vmatprep.subr.mxu0 0.0
    %809 = vmatpush1.msra.mxu0 0.0
    %810 = vmatprep.subr.mxu0 0.0
    %811 = vmatpush1.msra.mxu0 0.0
    %812 = vmatprep.subr.mxu0 0.0
    %813 = vmatpush1.msra.mxu0 0.0
    %814 = vmatprep.subr.mxu0 0.0
    %815 = vmatpush1.msra.mxu0 0.0
    %816 = vmatprep.subr.mxu0 0.0
    %817 = vmatpush1.msra.mxu0 0.0
    %818 = vmatprep.mubr.f32.mxu0 0.0
    %819 = vmatmul.mubr.f32.gmra.mrb[0].mxu0 %v752
    %v820 = vpop.f32.mrb[0].mxu0
    %v821 = vadd.f32 0.0, %v820
    %v822 = vpop.f32.mrb[0].mxu0
    %v823 = vadd.f32 0.0, %v822
    %824 = vdwg.mxu0
    %v825 = vadd.f32 %v180, %v821
    %v826 = vadd.f32 %v182, %v823
    %v827 = vxor.u32 %v825, 2147483648
    %v828 = vxor.u32 %v826, 2147483648
    %v829 = vmul.f32 %v827, 1.442695
    %v830 = vpow.pop %v829
    %v831 = vmul.f32 %v828, 1.442695
    %v832 = vpow.pop %v831
    %v833 = vadd.f32 %v830, 1.0
    %v834 = vadd.f32 %v832, 1.0
    %v835 = vrcp.pop %v833
    %v836 = vmul.f32 1.0, %v835
    %v837 = vrcp.pop %v834
    %v838 = vmul.f32 1.0, %v837
    %v839 = vmul.f32 %v838, 2.0
    %v840 = vsub.f32 %v839, 1.0
    %v841 = vmul.f32 %v836, %v746
    %v842 = vmul.f32 %v836, %v840
    %844 = vrot.lane.b32.xlu0 %v842, 64
    %v845 = vpop.permute.xlu0 %844
    %v847 = vadd.f32 %v841, %v845
    %v848 = vtanh.pop %v847
    %v849 = vmul.f32 %v838, %v848
    %851 = vrot.lane.b32.xlu0 %v849, 64
    %v852 = vpop.permute.xlu0 %851
    %v853 = vsel %vm242, %v852, 0
    %855 = vmatprep.subr.mxu0 %v197
    %856 = vmatpush1.msra.mxu0 %v196
    %857 = vmatprep.subr.mxu0 %v199
    %858 = vmatpush1.msra.mxu0 %v198
    %859 = vmatprep.subr.mxu0 %v201
    %860 = vmatpush1.msra.mxu0 %v200
    %861 = vmatprep.subr.mxu0 %v203
    %862 = vmatpush1.msra.mxu0 %v202
    %863 = vmatprep.subr.mxu0 %v205
    %864 = vmatpush1.msra.mxu0 %v204
    %865 = vmatprep.subr.mxu0 %v207
    %866 = vmatpush1.msra.mxu0 %v206
    %867 = vmatprep.subr.mxu0 %v209
    %868 = vmatpush1.msra.mxu0 %v208
    %869 = vmatprep.subr.mxu0 %v211
    %870 = vmatpush1.msra.mxu0 %v210
    %871 = vmatprep.subr.mxu0 0.0
    %872 = vmatpush1.msra.mxu0 0.0
    %873 = vmatprep.subr.mxu0 0.0
    %874 = vmatpush1.msra.mxu0 0.0
    %875 = vmatprep.subr.mxu0 0.0
    %876 = vmatpush1.msra.mxu0 0.0
    %877 = vmatprep.subr.mxu0 0.0
    %878 = vmatpush1.msra.mxu0 0.0
    %879 = vmatprep.subr.mxu0 0.0
    %880 = vmatpush1.msra.mxu0 0.0
    %881 = vmatprep.subr.mxu0 0.0
    %882 = vmatpush1.msra.mxu0 0.0
    %883 = vmatprep.subr.mxu0 0.0
    %884 = vmatpush1.msra.mxu0 0.0
    %885 = vmatprep.subr.mxu0 0.0
    %886 = vmatpush1.msra.mxu0 0.0
    %887 = vmatprep.subr.mxu0 0.0
    %888 = vmatpush1.msra.mxu0 0.0
    %889 = vmatprep.subr.mxu0 0.0
    %890 = vmatpush1.msra.mxu0 0.0
    %891 = vmatprep.subr.mxu0 0.0
    %892 = vmatpush1.msra.mxu0 0.0
    %893 = vmatprep.subr.mxu0 0.0
    %894 = vmatpush1.msra.mxu0 0.0
    %895 = vmatprep.subr.mxu0 0.0
    %896 = vmatpush1.msra.mxu0 0.0
    %897 = vmatprep.subr.mxu0 0.0
    %898 = vmatpush1.msra.mxu0 0.0
    %899 = vmatprep.subr.mxu0 0.0
    %900 = vmatpush1.msra.mxu0 0.0
    %901 = vmatprep.subr.mxu0 0.0
    %902 = vmatpush1.msra.mxu0 0.0
    %903 = vmatprep.subr.mxu0 0.0
    %904 = vmatpush1.msra.mxu0 0.0
    %905 = vmatprep.subr.mxu0 0.0
    %906 = vmatpush1.msra.mxu0 0.0
    %907 = vmatprep.subr.mxu0 0.0
    %908 = vmatpush1.msra.mxu0 0.0
    %909 = vmatprep.subr.mxu0 0.0
    %910 = vmatpush1.msra.mxu0 0.0
    %911 = vmatprep.subr.mxu0 0.0
    %912 = vmatpush1.msra.mxu0 0.0
    %913 = vmatprep.subr.mxu0 0.0
    %914 = vmatpush1.msra.mxu0 0.0
    %915 = vmatprep.subr.mxu0 0.0
    %916 = vmatpush1.msra.mxu0 0.0
    %917 = vmatprep.subr.mxu0 0.0
    %918 = vmatpush1.msra.mxu0 0.0
    %919 = vmatprep.mubr.f32.mxu0 0.0
    %920 = vmatmul.mubr.f32.gmra.mrb[0].mxu0 %v853
    %v921 = vpop.f32.mrb[0].mxu0
    %v922 = vadd.f32 0.0, %v921
    %v923 = vpop.f32.mrb[0].mxu0
    %v924 = vadd.f32 0.0, %v923
    %925 = vdwg.mxu0
    %v926 = vadd.f32 %v186, %v922
    %v927 = vadd.f32 %v188, %v924
    %v928 = vxor.u32 %v926, 2147483648
    %v929 = vxor.u32 %v927, 2147483648
    %v930 = vmul.f32 %v928, 1.442695
    %v931 = vpow.pop %v930
    %v932 = vmul.f32 %v929, 1.442695
    %v933 = vpow.pop %v932
    %v934 = vadd.f32 %v931, 1.0
    %v935 = vadd.f32 %v933, 1.0
    %v936 = vrcp.pop %v934
    %v937 = vmul.f32 1.0, %v936
    %v938 = vrcp.pop %v935
    %v939 = vmul.f32 1.0, %v938
    %v940 = vmul.f32 %v939, 2.0
    %v941 = vsub.f32 %v940, 1.0
    %v942 = vmul.f32 %v937, %v847
    %v943 = vmul.f32 %v937, %v941
    %945 = vrot.lane.b32.xlu0 %v943, 64
    %v946 = vpop.permute.xlu0 %945
    %v948 = vadd.f32 %v942, %v946
    %v949 = vtanh.pop %v948
    %v950 = vmul.f32 %v939, %v949
    %952 = vrot.lane.b32.xlu0 %v950, 64
    %v953 = vpop.permute.xlu0 %952
    %v954 = vsel %vm242, %v953, 0
    %956 = vmatprep.subr.mxu0 %v197
    %957 = vmatpush1.msra.mxu0 %v196
    %958 = vmatprep.subr.mxu0 %v199
    %959 = vmatpush1.msra.mxu0 %v198
    %960 = vmatprep.subr.mxu0 %v201
    %961 = vmatpush1.msra.mxu0 %v200
    %962 = vmatprep.subr.mxu0 %v203
    %963 = vmatpush1.msra.mxu0 %v202
    %964 = vmatprep.subr.mxu0 %v205
    %965 = vmatpush1.msra.mxu0 %v204
    %966 = vmatprep.subr.mxu0 %v207
    %967 = vmatpush1.msra.mxu0 %v206
    %968 = vmatprep.subr.mxu0 %v209
    %969 = vmatpush1.msra.mxu0 %v208
    %970 = vmatprep.subr.mxu0 %v211
    %971 = vmatpush1.msra.mxu0 %v210
    %972 = vmatprep.subr.mxu0 0.0
    %973 = vmatpush1.msra.mxu0 0.0
    %974 = vmatprep.subr.mxu0 0.0
    %975 = vmatpush1.msra.mxu0 0.0
    %976 = vmatprep.subr.mxu0 0.0
    %977 = vmatpush1.msra.mxu0 0.0
    %978 = vmatprep.subr.mxu0 0.0
    %979 = vmatpush1.msra.mxu0 0.0
    %980 = vmatprep.subr.mxu0 0.0
    %981 = vmatpush1.msra.mxu0 0.0
    %982 = vmatprep.subr.mxu0 0.0
    %983 = vmatpush1.msra.mxu0 0.0
    %984 = vmatprep.subr.mxu0 0.0
    %985 = vmatpush1.msra.mxu0 0.0
    %986 = vmatprep.subr.mxu0 0.0
    %987 = vmatpush1.msra.mxu0 0.0
    %988 = vmatprep.subr.mxu0 0.0
    %989 = vmatpush1.msra.mxu0 0.0
    %990 = vmatprep.subr.mxu0 0.0
    %991 = vmatpush1.msra.mxu0 0.0
    %992 = vmatprep.subr.mxu0 0.0
    %993 = vmatpush1.msra.mxu0 0.0
    %994 = vmatprep.subr.mxu0 0.0
    %995 = vmatpush1.msra.mxu0 0.0
    %996 = vmatprep.subr.mxu0 0.0
    %997 = vmatpush1.msra.mxu0 0.0
    %998 = vmatprep.subr.mxu0 0.0
    %999 = vmatpush1.msra.mxu0 0.0
    %1000 = vmatprep.subr.mxu0 0.0
    %1001 = vmatpush1.msra.mxu0 0.0
    %1002 = vmatprep.subr.mxu0 0.0
    %1003 = vmatpush1.msra.mxu0 0.0
    %1004 = vmatprep.subr.mxu0 0.0
    %1005 = vmatpush1.msra.mxu0 0.0
    %1006 = vmatprep.subr.mxu0 0.0
    %1007 = vmatpush1.msra.mxu0 0.0
    %1008 = vmatprep.subr.mxu0 0.0
    %1009 = vmatpush1.msra.mxu0 0.0
    %1010 = vmatprep.subr.mxu0 0.0
    %1011 = vmatpush1.msra.mxu0 0.0
    %1012 = vmatprep.subr.mxu0 0.0
    %1013 = vmatpush1.msra.mxu0 0.0
    %1014 = vmatprep.subr.mxu0 0.0
    %1015 = vmatpush1.msra.mxu0 0.0
    %1016 = vmatprep.subr.mxu0 0.0
    %1017 = vmatpush1.msra.mxu0 0.0
    %1018 = vmatprep.subr.mxu0 0.0
    %1019 = vmatpush1.msra.mxu0 0.0
    %1020 = vmatprep.mubr.f32.mxu0 0.0
    %1021 = vmatmul.mubr.f32.gmra.mrb[0].mxu0 %v954
    %v1022 = vpop.f32.mrb[0].mxu0
    %v1023 = vadd.f32 0.0, %v1022
    %v1024 = vpop.f32.mrb[0].mxu0
    %v1025 = vadd.f32 0.0, %v1024
    %1026 = vdwg.mxu0
    %v1027 = vadd.f32 %v192, %v1023
    %v1028 = vadd.f32 %v194, %v1025
    %v1029 = vxor.u32 %v1027, 2147483648
    %v1030 = vxor.u32 %v1028, 2147483648
    %v1031 = vmul.f32 %v1029, 1.442695
    %v1032 = vpow.pop %v1031
    %v1033 = vmul.f32 %v1030, 1.442695
    %v1034 = vpow.pop %v1033
    %v1035 = vadd.f32 %v1032, 1.0
    %v1036 = vadd.f32 %v1034, 1.0
    %v1037 = vrcp.pop %v1035
    %v1038 = vmul.f32 1.0, %v1037
    %v1039 = vrcp.pop %v1036
    %v1040 = vmul.f32 1.0, %v1039
    %v1041 = vmul.f32 %v1040, 2.0
    %v1042 = vsub.f32 %v1041, 1.0
    %v1043 = vmul.f32 %v1038, %v948
    %v1044 = vmul.f32 %v1038, %v1042
    %1046 = vrot.lane.b32.xlu0 %v1044, 64
    %v1047 = vpop.permute.xlu0 %1046
    %v1049 = vadd.f32 %v1043, %v1047
    %v1050 = vtanh.pop %v1049
    %v1051 = vmul.f32 %v1040, %v1050
    %v1052 = vld [vmem:[%s4] sm:$0xff]
    %v1053 = vld [vmem:[%s4 + $0x8] sm:$0xff]
    %v1054 = vld [vmem:[%s4 + $0x10] sm:$0xff]
    %v1055 = vld [vmem:[%s4 + $0x18] sm:$0xff]
    %v1056 = vld [vmem:[%s5] sm:$0x1]
    %v1058 = vlaneseq
    %v1059 = vshrl.u32 %v1058, 7
    %v1060 = vsub.s32 0, %v1059
    %v1061 = vrot.slane %v1056, %v1060
    %1064 = vrot.lane.b32.xlu0 %v1051, 32
    %v1065 = vpop.permute.xlu0 %1064
    %vm1066 = vcmask 261120
    %v1067 = vsel %vm1066, %v1065, 0
    %1069 = vmatprep.subr.mxu0 0.0
    %1070 = vmatpush1.msra.mxu0 %v1052
    %1071 = vmatprep.subr.mxu0 0.0
    %1072 = vmatpush1.msra.mxu0 %v1053
    %1073 = vmatprep.subr.mxu0 0.0
    %1074 = vmatpush1.msra.mxu0 %v1054
    %1075 = vmatprep.subr.mxu0 0.0
    %1076 = vmatpush1.msra.mxu0 %v1055
    %1077 = vmatprep.subr.mxu0 0.0
    %1078 = vmatpush1.msra.mxu0 0.0
    %1079 = vmatprep.subr.mxu0 0.0
    %1080 = vmatpush1.msra.mxu0 0.0
    %1081 = vmatprep.subr.mxu0 0.0
    %1082 = vmatpush1.msra.mxu0 0.0
    %1083 = vmatprep.subr.mxu0 0.0
    %1084 = vmatpush1.msra.mxu0 0.0
    %1085 = vmatprep.subr.mxu0 0.0
    %1086 = vmatpush1.msra.mxu0 0.0
    %1087 = vmatprep.subr.mxu0 0.0
    %1088 = vmatpush1.msra.mxu0 0.0
    %1089 = vmatprep.subr.mxu0 0.0
    %1090 = vmatpush1.msra.mxu0 0.0
    %1091 = vmatprep.subr.mxu0 0.0
    %1092 = vmatpush1.msra.mxu0 0.0
    %1093 = vmatprep.subr.mxu0 0.0
    %1094 = vmatpush1.msra.mxu0 0.0
    %1095 = vmatprep.subr.mxu0 0.0
    %1096 = vmatpush1.msra.mxu0 0.0
    %1097 = vmatprep.subr.mxu0 0.0
    %1098 = vmatpush1.msra.mxu0 0.0
    %1099 = vmatprep.subr.mxu0 0.0
    %1100 = vmatpush1.msra.mxu0 0.0
    %1101 = vmatprep.subr.mxu0 0.0
    %1102 = vmatpush1.msra.mxu0 0.0
    %1103 = vmatprep.subr.mxu0 0.0
    %1104 = vmatpush1.msra.mxu0 0.0
    %1105 = vmatprep.subr.mxu0 0.0
    %1106 = vmatpush1.msra.mxu0 0.0
    %1107 = vmatprep.subr.mxu0 0.0
    %1108 = vmatpush1.msra.mxu0 0.0
    %1109 = vmatprep.subr.mxu0 0.0
    %1110 = vmatpush1.msra.mxu0 0.0
    %1111 = vmatprep.subr.mxu0 0.0
    %1112 = vmatpush1.msra.mxu0 0.0
    %1113 = vmatprep.subr.mxu0 0.0
    %1114 = vmatpush1.msra.mxu0 0.0
    %1115 = vmatprep.subr.mxu0 0.0
    %1116 = vmatpush1.msra.mxu0 0.0
    %1117 = vmatprep.subr.mxu0 0.0
    %1118 = vmatpush1.msra.mxu0 0.0
    %1119 = vmatprep.subr.mxu0 0.0
    %1120 = vmatpush1.msra.mxu0 0.0
    %1121 = vmatprep.subr.mxu0 0.0
    %1122 = vmatpush1.msra.mxu0 0.0
    %1123 = vmatprep.subr.mxu0 0.0
    %1124 = vmatpush1.msra.mxu0 0.0
    %1125 = vmatprep.subr.mxu0 0.0
    %1126 = vmatpush1.msra.mxu0 0.0
    %1127 = vmatprep.subr.mxu0 0.0
    %1128 = vmatpush1.msra.mxu0 0.0
    %1129 = vmatprep.subr.mxu0 0.0
    %1130 = vmatpush1.msra.mxu0 0.0
    %1131 = vmatprep.subr.mxu0 0.0
    %1132 = vmatpush1.msra.mxu0 0.0
    %1133 = vmatprep.mubr.f32.mxu0 0.0
    %1134 = vmatmul.mubr.f32.gmra.mrb[0].mxu0 %v1067
    %v1135 = vpop.f32.mrb[0].mxu0
    %v1136 = vadd.f32 %v1061, %v1135
    %v1137 = vpop.f32.mrb[0].mxu0
    %1138 = vdwg.mxu0
    %v1139 = vmul.f32 %v1136, %v1136
    %vm1140 = vcmask 123904
    %v1141 = vsel %vm1140, %v1139, 0.0
    %1142 = vadd.xlane.f32.xlu0 %v1141
    %v1143 = vpop.xlane.xlu0 %1142
    %v1144 = vrot.slane %v1143, 4
    %v1145 = vadd.f32 %v1143, %v1144
    %v1146 = vrot.slane %v1145, 2
    %v1147 = vadd.f32 %v1145, %v1146
    %v1148 = vrot.slane %v1147, 1
    %v1149 = vadd.f32 %v1147, %v1148
    %s1150 = vtos %v1149
    %v1151 = vstv %s1150
    %v1152 = vrsqrt.pop %v1151
    %s1153 = vtos %v1152
    %v1154 = vstv %s1153
    %v1155 = vmul.f32 %v1136, %v1154
    %1156 = vst.msk [vmem:[#allocation2] sm:$0x3] %vm1140, %v1155
    // Predicated region
    $region26: #{speaker_encoder.1} parent=1 // pred_check
      _
    $region27: #{speaker_encoder.1} parent=1 // pred_check_branch
      %1158 = sbr.rel (0) target = $region29
    $region28: #{speaker_encoder.1} parent=1 // pred_region
      %s1160 = ssub.s32 32, 32
      %1161 = vsyncadd [#allocation3], %s1160
      %s1163 = sshll.u32 [#allocation2], 4
      %s1164 = int_to_ptr.vmem [resolvable:$true] %s1163
      %1166 = dma.vmem_to_hbm [thread:$0]  %s1164, 32, %s6, [#allocation3]
    $region29: #{speaker_encoder.1} parent=1 // pred_fallthru
      _
    // Predicated region
    $region30: #{speaker_encoder.1} parent=1 // pred_check
      _
    $region31: #{speaker_encoder.1} parent=1 // pred_check_branch
      %1168 = sbr.rel (0) target = $region33
    $region32: #{speaker_encoder.1} parent=1 // pred_region
      %1169 = dma.done [#allocation3], 32
    $region33: #{speaker_encoder.1} parent=1 // pred_fallthru
      _
    %1170 = vsyncpa [#allocation3], 1

</llo_original>
